<compile_context>
chip_gen: v5e
topology: v5e:2x2
jax: 0.10.0
libtpu: 0.0.40
codegen_flags: <defaults>
</compile_context>

<pallas_src>
import math

import jax
import jax.numpy as jnp
from jax.experimental import pallas as pl
from jax.experimental.pallas import tpu as pltpu


def _round_up(x, m):
    return (x + m - 1) // m * m


def _pick_heads_per_step(H, dk, S, bias_itemsize, *, mxu_width=256,
                         bias_budget=8 * 1024 * 1024):
    """Smallest divisor G of H with G*dk wide enough for the MXU, whose
    position-bias block (G,S,S) still fits a modest VMEM budget, and whose
    weight block satisfies the (8,128) BlockSpec constraint."""
    divisors = [d for d in range(1, H + 1) if H % d == 0]
    want = min(mxu_width, H * dk)
    for d in divisors:
        if (d * dk >= want and (d == H or (d * dk) % 128 == 0)
                and d * S * S * bias_itemsize <= bias_budget):
            return d
    for d in reversed(divisors):
        if (d == H or (d * dk) % 128 == 0) and d * S * S * bias_itemsize <= bias_budget:
            return d
    return H


# ----------------------------------------------------------------------------
# Self-attention sub-layer kernel
# grid = (batch, head_group); head-group axis is the "arbitrary" reduction.
# ----------------------------------------------------------------------------
def _make_attn_kernel(eps, dk, heads_per_step):
    G = heads_per_step

    def attn_kernel(x_ref, lnw_ref, wqkv_ref, wo_ref, bias_ref, mask_ref, neg_ref,
                    o_ref, hn_ref, acc_ref):
        g = pl.program_id(1)

        @pl.when(g == 0)
        def _():
            x = x_ref[0].astype(jnp.float32)                       # [S, D]
            var = jnp.mean(x * x, axis=-1, keepdims=True)
            hn = x * jax.lax.rsqrt(var + eps)
            hn = lnw_ref[...].astype(jnp.float32) * hn             # [1,D]*[S,D]
            hn_ref[...] = hn.astype(hn_ref.dtype)                  # cast once to MXU dtype
            acc_ref[...] = x                                       # residual seeds accumulator

        hn = hn_ref[...]                                           # [S, D]
        # One wide QKV projection for this group's G heads: [S, 3*G*dk]
        qkv = jnp.dot(hn, wqkv_ref[...], preferred_element_type=jnp.float32)
        mask = mask_ref[0].astype(jnp.float32)                     # [S, S]
        neg = neg_ref[0].astype(jnp.float32)                       # -10000*(1-mask), precomputed

        ctx_cols = []
        for i in range(G):                                         # static per-head loop
            off = i * 3 * dk
            q = qkv[:, off:off + dk]                               # 1/sqrt(dk) folded into Wq
            k = qkv[:, off + dk:off + 2 * dk]
            v = qkv[:, off + 2 * dk:off + 3 * dk]
            s = jax.lax.dot_general(q, k, (((1,), (1,)), ((), ())),
                                    preferred_element_type=jnp.float32)   # [S, S]
            s = s * mask + neg + bias_ref[i].astype(jnp.float32)
            m = jnp.max(s, axis=-1, keepdims=True)
            p = jnp.exp(s - m)
            l = jnp.sum(p, axis=-1, keepdims=True)
            ctx = jnp.dot(p, v, preferred_element_type=jnp.float32)       # [S, dk]
            ctx_cols.append(ctx * pl.reciprocal(l, approx=False))         # deferred softmax norm
        ctx_g = jnp.concatenate(ctx_cols, axis=-1) if G > 1 else ctx_cols[0]   # [S, G*dk]

        # One output projection per head group: K = G*dk (>=128) of MXU depth.
        acc_ref[...] += jnp.dot(ctx_g.astype(wo_ref.dtype), wo_ref[0],
                                preferred_element_type=jnp.float32)            # [S, D]

        @pl.when(g == pl.num_programs(1) - 1)
        def _():
            o_ref[0] = acc_ref[...].astype(o_ref.dtype)

    return attn_kernel


def parallel_self_attention(x, attention_mask, position_bias, ln_weight,
                            wq, wk, wv, wo, *, num_heads, eps=1e-6, attn_scale=True,
                            heads_per_step=None, vmem_limit_bytes=64 * 1024 * 1024):
    """x: [B,S,D]; mask: [B,S,S]; position_bias: [H,S,S];
    wq/wk/wv: [D, H*dk]; wo: [H*dk, D] (pre-transposed nn.Linear weights)."""
    B, S, D = x.shape
    Dh = wq.shape[1]
    H = num_heads
    assert Dh % H == 0
    dk = Dh // H
    scale = (1.0 / math.sqrt(dk)) if attn_scale else 1.0

    G = heads_per_step or _pick_heads_per_step(H, dk, S, position_bias.dtype.itemsize)
    assert H % G == 0
    nG = H // G

    # Fused per-head-interleaved [q_h | k_h | v_h] weight, scale folded into Wq.
    wqkv = jnp.stack([(wq * scale).reshape(D, H, dk),
                      wk.reshape(D, H, dk),
                      wv.reshape(D, H, dk)], axis=2).reshape(D, H * 3 * dk)
    wo_g = wo.reshape(nG, G * dk, D)                        # group rows of Wo
    lnw2 = ln_weight.reshape(1, D)
    neg_mask = (-10000.0 * (1.0 - attention_mask)).astype(attention_mask.dtype)

    flops = int(B * (2 * S * D * 3 * Dh                     # fused QKV projections
                     + H * 2 * (2 * S * S * dk)             # scores + ctx per head
                     + 2 * S * Dh * D))                     # output projection
    bytes_accessed = int(
        2 * B * S * D * x.dtype.itemsize
        + 2 * B * S * S * attention_mask.dtype.itemsize
        + B * H * S * S * position_bias.dtype.itemsize
        + B * (wqkv.size * wqkv.dtype.itemsize + wo.size * wo.dtype.itemsize))
    cost = pl.CostEstimate(flops=flops, transcendentals=int(B * H * S * S),
                           bytes_accessed=bytes_accessed)

    # TODO(synk): for very long S on v7x (64 MiB VMEM) add a query-tile grid axis
    # (flash-style online softmax) instead of whole-[S,S] score tiles.
    out = pl.pallas_call(
        _make_attn_kernel(eps, dk, G),
        out_shape=jax.ShapeDtypeStruct((B, S, D), x.dtype),
        grid_spec=pltpu.PrefetchScalarGridSpec(
            num_scalar_prefetch=0,
            grid=(B, nG),
            in_specs=[
                pl.BlockSpec((1, S, D), lambda b, g: (b, 0, 0)),        # x
                pl.BlockSpec((1, D), lambda b, g: (0, 0)),              # layernorm weight
                pl.BlockSpec((D, 3 * G * dk), lambda b, g: (0, g)),     # fused QKV weights (group)
                pl.BlockSpec((1, G * dk, D), lambda b, g: (g, 0, 0)),   # Wo rows (group)
                pl.BlockSpec((G, S, S), lambda b, g: (g, 0, 0)),        # position bias (group heads)
                pl.BlockSpec((1, S, S), lambda b, g: (b, 0, 0)),        # attention mask
                pl.BlockSpec((1, S, S), lambda b, g: (b, 0, 0)),        # -10000*(1-mask)
            ],
            out_specs=pl.BlockSpec((1, S, D), lambda b, g: (b, 0, 0)),
            scratch_shapes=[
                pltpu.VMEM((S, D), wqkv.dtype),      # cached normed hidden (MXU dtype)
                pltpu.VMEM((S, D), jnp.float32),     # residual + projection accumulator
            ],
        ),
        compiler_params=pltpu.CompilerParams(
            dimension_semantics=("parallel", "arbitrary"),
            vmem_limit_bytes=vmem_limit_bytes),
        cost_estimate=cost,
    )(x, lnw2, wqkv, wo_g, position_bias, attention_mask, neg_mask)
    return out


# ----------------------------------------------------------------------------
# Gated-GELU FF sub-layer kernel (grid = (token tiles, d_ff tiles))
# ----------------------------------------------------------------------------
def _make_ff_kernel(eps, tf):
    def ff_kernel(x_ref, lnw_ref, wcat_ref, wo_ref, o_ref, h_ref, acc_ref):
        f = pl.program_id(1)

        @pl.when(f == 0)
        def _():
            x = x_ref[...].astype(jnp.float32)
            var = jnp.mean(x * x, axis=-1, keepdims=True)
            h = x * jax.lax.rsqrt(var + eps)
            h = lnw_ref[...].astype(jnp.float32) * h
            h_ref[...] = h.astype(h_ref.dtype)        # cast once to MXU/weight dtype
            acc_ref[...] = x                          # residual seeds the accumulator

        h = h_ref[...]                                               # [tm, D]
        gl = jnp.dot(h, wcat_ref[...], preferred_element_type=jnp.float32)  # [tm, 2*tf]
        g = gl[:, :tf]                                               # wi_0 block
        lin = gl[:, tf:]                                             # wi_1 block
        # gelu_new (tanh approximation), kept in f32 on the [tm, tf] tile only
        g = 0.5 * g * (1.0 + jnp.tanh(0.7978845608028654 * g * (1.0 + 0.044715 * g * g)))
        ff = (g * lin).astype(wo_ref.dtype)
        acc_ref[...] += jnp.dot(ff, wo_ref[...], preferred_element_type=jnp.float32)

        @pl.when(f == pl.num_programs(1) - 1)
        def _():
            o_ref[...] = acc_ref[...].astype(o_ref.dtype)

    return ff_kernel


def parallel_ff(x, ln_weight, wi0, wi1, wo, *, eps=1e-6, tm=256, tf=512,
                vmem_limit_bytes=48 * 1024 * 1024):
    """x: [B,S,D]; ln_weight: [D]; wi0/wi1: [D,F]; wo: [F,D] (pre-transposed)."""
    B, S, D = x.shape
    F = wi0.shape[1]
    assert F % 128 == 0 and F >= 128
    T = B * S

    # Token tile: 128/256 for real workloads; shrink (8-aligned) + pad for small T.
    tm_eff = min(tm, _round_up(T, 8))
    Tp = _round_up(T, tm_eff)
    x2 = x.reshape(T, D)
    if Tp != T:
        x2 = jnp.pad(x2, ((0, Tp - T), (0, 0)))

    # d_ff tile (multiple of 128, divides F).  tf == F => weights stay VMEM-resident.
    tf_eff = min(tf, F)
    while F % tf_eff:
        tf_eff -= 128
    nf = F // tf_eff

    # Fuse wi_0 / wi_1 into one weight with the two gates adjacent per F-block,
    # so each grid step does a single [tm, D] x [D, 2*tf] dot.
    wcat = jnp.concatenate(
        [wi0.reshape(D, nf, tf_eff), wi1.reshape(D, nf, tf_eff)], axis=-1
    ).reshape(D, nf * 2 * tf_eff)
    lnw2 = ln_weight.reshape(1, D)

    weight_bytes = int(wcat.size) * wcat.dtype.itemsize + int(wo.size) * wo.dtype.itemsize
    io_bytes = 2 * Tp * D * x.dtype.itemsize
    cost = pl.CostEstimate(
        flops=int(2 * Tp * D * (2 * F) + 2 * Tp * F * D),
        transcendentals=int(Tp * F),
        bytes_accessed=int(weight_bytes * max(1, Tp // tm_eff) + io_bytes),
    )

    out2 = pl.pallas_call(
        _make_ff_kernel(eps, tf_eff),
        out_shape=jax.ShapeDtypeStruct((Tp, D), x.dtype),
        grid_spec=pltpu.PrefetchScalarGridSpec(
            num_scalar_prefetch=0,
            grid=(Tp // tm_eff, nf),
            in_specs=[
                pl.BlockSpec((tm_eff, D), lambda i, f: (i, 0)),          # x tokens
                pl.BlockSpec((1, D), lambda i, f: (0, 0)),               # layernorm weight
                pl.BlockSpec((D, 2 * tf_eff), lambda i, f: (0, f)),      # fused wi block
                pl.BlockSpec((tf_eff, D), lambda i, f: (f, 0)),          # wo block
            ],
            out_specs=pl.BlockSpec((tm_eff, D), lambda i, f: (i, 0)),
            scratch_shapes=[
                pltpu.VMEM((tm_eff, D), wcat.dtype),     # cached RMSNorm output
                pltpu.VMEM((tm_eff, D), jnp.float32),    # residual + f32 accumulator
            ],
        ),
        compiler_params=pltpu.CompilerParams(
            dimension_semantics=("parallel", "arbitrary"),
            vmem_limit_bytes=vmem_limit_bytes),
        cost_estimate=cost,
    )(x2, lnw2, wcat, wo)

    return out2[:T].reshape(B, S, D)


# ----------------------------------------------------------------------------
# Relative position bias (tiny embedding gather; done in plain JAX outside Pallas)
# ----------------------------------------------------------------------------
def _relative_position_bucket(relative_position, *, bidirectional=True,
                              num_buckets=32, max_distance=128):
    relative_buckets = jnp.zeros_like(relative_position)
    if bidirectional:
        num_buckets //= 2
        relative_buckets = relative_buckets + (relative_position > 0).astype(jnp.int32) * num_buckets
        relative_position = jnp.abs(relative_position)
    else:
        relative_position = -jnp.minimum(relative_position, 0)
    max_exact = num_buckets // 2
    is_small = relative_position < max_exact
    rel_f = jnp.maximum(relative_position.astype(jnp.float32), 1.0)  # avoid log(0); masked below
    rel_if_large = max_exact + (
        jnp.log(rel_f / max_exact) / math.log(max_distance / max_exact)
        * (num_buckets - max_exact)).astype(jnp.int32)
    rel_if_large = jnp.minimum(rel_if_large, num_buckets - 1)
    return relative_buckets + jnp.where(is_small, relative_position, rel_if_large)


def compute_position_bias(rel_emb, q_len, k_len, *, bidirectional=True,
                          num_buckets=32, max_distance=128):
    ctx = jnp.arange(q_len, dtype=jnp.int32)[:, None]
    mem = jnp.arange(k_len, dtype=jnp.int32)[None, :]
    buckets = _relative_position_bucket(mem - ctx, bidirectional=bidirectional,
                                        num_buckets=num_buckets, max_distance=max_distance)
    values = rel_emb[buckets]                       # [q, k, H]
    return jnp.transpose(values, (2, 0, 1))         # [H, q, k]


# ----------------------------------------------------------------------------
# Full ParallelBlock (encoder path). Dropouts are identity (eval mode).
# TODO(synk): decoder path (cross-attention + past_key_value cache) not implemented.
# ----------------------------------------------------------------------------
def parallel_block(x, attention_mask, position_bias, params, *,
                   num_heads, eps=1e-6, attn_scale=True, tm=256, tf=512):
    h1 = parallel_self_attention(
        x, attention_mask, position_bias,
        params["ln1_w"], params["wq"], params["wk"], params["wv"], params["wo_attn"],
        num_heads=num_heads, eps=eps, attn_scale=attn_scale)
    out = parallel_ff(
        h1, params["ln2_w"], params["wi0"], params["wi1"], params["wo_ff"],
        eps=eps, tm=tm, tf=tf)
    return out


# ----------------------------------------------------------------------------
# Pure-JAX reference for validation
# ----------------------------------------------------------------------------
def _gelu_new(x):
    return 0.5 * x * (1.0 + jnp.tanh(0.7978845608028654 * x * (1.0 + 0.044715 * x * x)))


def _reference_block(x, mask, pos_bias, params, *, num_heads, eps=1e-6, attn_scale=True):
    B, S, D = x.shape
    H = num_heads
    dk = params["wq"].shape[1] // H
    xf = x.astype(jnp.float32)

    var = jnp.mean(xf * xf, axis=-1, keepdims=True)
    hn = xf * jax.lax.rsqrt(var + eps) * params["ln1_w"]

    def heads(t):
        return t.reshape(B, S, H, dk).transpose(0, 2, 1, 3)

    q, k, v = heads(hn @ params["wq"]), heads(hn @ params["wk"]), heads(hn @ params["wv"])
    scores = jnp.einsum("bhqd,bhkd->bhqk", q, k)
    if attn_scale:
        scores = scores / math.sqrt(dk)
    m = mask[:, None, :, :]
    scores = scores * m + (-10000.0 * (1.0 - m) + pos_bias[None])
    mx = jnp.max(scores, axis=-1, keepdims=True)
    p = jnp.exp(scores - mx)
    p = p / jnp.sum(p, axis=-1, keepdims=True)
    ctx = jnp.einsum("bhqk,bhkd->bhqd", p, v)
    ctx = ctx.transpose(0, 2, 1, 3).reshape(B, S, H * dk)
    h1 = xf + ctx @ params["wo_attn"]

    var2 = jnp.mean(h1 * h1, axis=-1, keepdims=True)
    hf = h1 * jax.lax.rsqrt(var2 + eps) * params["ln2_w"]
    ff = (_gelu_new(hf @ params["wi0"]) * (hf @ params["wi1"])) @ params["wo_ff"]
    return (h1 + ff).astype(x.dtype)


if __name__ == "__main__":
    # Small EVA-like config: batch=2, seq=8, d_model=128, d_ff=256, heads=8, d_kv=16
    B, S, D, F, H, DK = 2, 8, 128, 256, 8, 16
    NUM_BUCKETS = 32
    key = jax.random.PRNGKey(0)
    ks = jax.random.split(key, 12)

    x = jax.random.normal(ks[0], (B, S, D), dtype=jnp.float32)

    params = {
        # self-attention sub-layer (nn.Linear weights stored pre-transposed [in, out])
        "ln1_w": 1.0 + 0.1 * jax.random.normal(ks[1], (D,), dtype=jnp.float32),
        "wq": jax.random.normal(ks[2], (D, H * DK), dtype=jnp.float32) * 0.02,
        "wk": jax.random.normal(ks[3], (D, H * DK), dtype=jnp.float32) * 0.02,
        "wv": jax.random.normal(ks[4], (D, H * DK), dtype=jnp.float32) * 0.02,
        "wo_attn": jax.random.normal(ks[5], (H * DK, D), dtype=jnp.float32) * 0.02,
        # FF sub-layer
        "ln2_w": 1.0 + 0.1 * jax.random.normal(ks[6], (D,), dtype=jnp.float32),
        "wi0": jax.random.normal(ks[7], (D, F), dtype=jnp.float32) * 0.02,
        "wi1": jax.random.normal(ks[8], (D, F), dtype=jnp.float32) * 0.02,
        "wo_ff": jax.random.normal(ks[9], (F, D), dtype=jnp.float32) * 0.02,
    }
    rel_emb = jax.random.normal(ks[10], (NUM_BUCKETS, H), dtype=jnp.float32) * 0.02

    # attention mask [B, S(query), S(key)]: batch 0 full, batch 1 pads last 2 keys
    key_valid = jnp.ones((B, S), dtype=jnp.float32).at[1, S - 2:].set(0.0)
    mask = jnp.broadcast_to(key_valid[:, None, :], (B, S, S))

    # relative position bias (encoder -> bidirectional)
    pos_bias = compute_position_bias(rel_emb, S, S, bidirectional=True,
                                     num_buckets=NUM_BUCKETS)

    out = parallel_block(x, mask, pos_bias, params, num_heads=H, attn_scale=True)
    out = jax.block_until_ready(out)

    ref = _reference_block(x, mask, pos_bias, params, num_heads=H, attn_scale=True)
    assert out.shape == (B, S, D)
    assert jnp.allclose(out, ref, atol=2e-4, rtol=2e-4), (
        "mismatch vs reference: max abs diff = %s" % float(jnp.max(jnp.abs(out - ref))))

    print("KERNEL_OK")
</pallas_src>

<mosaic_0001>
module attributes {stable_mosaic.version = 11 : i64} {
  func.func @attn_kernel(%arg0: i32, %arg1: i32, %arg2: memref<1x8x128xf32, #tpu.memory_space<vmem>>, %arg3: memref<1x128xf32, #tpu.memory_space<vmem>>, %arg4: memref<128x384xf32, #tpu.memory_space<vmem>>, %arg5: memref<1x128x128xf32, #tpu.memory_space<vmem>>, %arg6: memref<8x8x8xf32, #tpu.memory_space<vmem>>, %arg7: memref<1x8x8xf32, #tpu.memory_space<vmem>>, %arg8: memref<1x8x8xf32, #tpu.memory_space<vmem>>, %arg9: memref<1x8x128xf32, #tpu.memory_space<vmem>>, %arg10: memref<8x128xf32, #tpu.memory_space<vmem>>, %arg11: memref<8x128xf32, #tpu.memory_space<vmem>>) attributes {dimension_semantics = [#tpu.dimension_semantics<parallel>, #tpu.dimension_semantics<arbitrary>], iteration_bounds = array<i64: 2, 1>, scalar_prefetch = 0 : i64, scratch_operands = 2 : i64, tpu.core_type = #tpu.core_type<tc>, window_params = [{transform_indices = @transform_0, window_bounds = array<i64: 1, 8, 128>}, {pipeline_mode = #tpu.pipeline_mode<synchronous>, transform_indices = @transform_1, window_bounds = array<i64: 1, 128>}, {transform_indices = @transform_2, window_bounds = array<i64: 128, 384>}, {transform_indices = @transform_3, window_bounds = array<i64: 1, 128, 128>}, {transform_indices = @transform_4, window_bounds = array<i64: 8, 8, 8>}, {transform_indices = @transform_5, window_bounds = array<i64: 1, 8, 8>}, {transform_indices = @transform_6, window_bounds = array<i64: 1, 8, 8>}, {transform_indices = @transform_7, window_bounds = array<i64: 1, 8, 128>}]} {
    %c0_i32 = arith.constant 0 : i32
    %0 = arith.cmpi eq, %arg1, %c0_i32 : i32
    %1 = arith.extui %0 : i1 to i32
    %c0_i32_0 = arith.constant 0 : i32
    %2 = arith.cmpi ne, %1, %c0_i32_0 : i32
    scf.if %2 {
      %c0_69 = arith.constant 0 : index
      %c0_70 = arith.constant 0 : index
      %c0_71 = arith.constant 0 : index
      %180 = vector.load %arg2[%c0_69, %c0_70, %c0_71] : memref<1x8x128xf32, #tpu.memory_space<vmem>>, vector<1x8x128xf32>
      %181 = vector.shape_cast %180 : vector<1x8x128xf32> to vector<8x128xf32>
      %182 = arith.mulf %181, %181 : vector<8x128xf32>
      %cst_72 = arith.constant dense<0.000000e+00> : vector<8xf32>
      %183 = vector.multi_reduction <add>, %182, %cst_72 [1] : vector<8x128xf32> to vector<8xf32>
      %184 = vector.shape_cast %183 : vector<8xf32> to vector<8x1xf32>
      %cst_73 = arith.constant 1.280000e+02 : f32
      %185 = vector.broadcast %cst_73 : f32 to vector<8x1xf32>
      %186 = arith.divf %184, %185 : vector<8x1xf32>
      %cst_74 = arith.constant 9.99999997E-7 : f32
      %187 = vector.broadcast %cst_74 : f32 to vector<8x1xf32>
      %188 = arith.addf %186, %187 : vector<8x1xf32>
      %189 = math.rsqrt %188 : vector<8x1xf32>
      %190 = vector.broadcast %189 : vector<8x1xf32> to vector<8x128xf32>
      %191 = arith.mulf %181, %190 : vector<8x128xf32>
      %c0_75 = arith.constant 0 : index
      %c0_76 = arith.constant 0 : index
      %192 = vector.load %arg3[%c0_75, %c0_76] : memref<1x128xf32, #tpu.memory_space<vmem>>, vector<1x128xf32>
      %193 = vector.broadcast %192 : vector<1x128xf32> to vector<8x128xf32>
      %194 = arith.mulf %193, %191 : vector<8x128xf32>
      %c0_77 = arith.constant 0 : index
      %c0_78 = arith.constant 0 : index
      %195 = vector.load %arg10[%c0_77, %c0_78] : memref<8x128xf32, #tpu.memory_space<vmem>>, vector<8x128xf32>
      tpu.vector_store %arg10[%c0_77, %c0_78], %194 {strides = array<i32>} : memref<8x128xf32, #tpu.memory_space<vmem>>, vector<8x128xf32>,
      %c0_79 = arith.constant 0 : index
      %c0_80 = arith.constant 0 : index
      %196 = vector.load %arg11[%c0_79, %c0_80] : memref<8x128xf32, #tpu.memory_space<vmem>>, vector<8x128xf32>
      tpu.vector_store %arg11[%c0_79, %c0_80], %181 {strides = array<i32>} : memref<8x128xf32, #tpu.memory_space<vmem>>, vector<8x128xf32>,
    } else {
    }
    %c0 = arith.constant 0 : index
    %c0_1 = arith.constant 0 : index
    %3 = vector.load %arg10[%c0, %c0_1] : memref<8x128xf32, #tpu.memory_space<vmem>>, vector<8x128xf32>
    %c0_2 = arith.constant 0 : index
    %c0_3 = arith.constant 0 : index
    %4 = vector.load %arg4[%c0_2, %c0_3] : memref<128x384xf32, #tpu.memory_space<vmem>>, vector<128x384xf32>
    %cst = arith.constant dense<0.000000e+00> : vector<8x384xf32>
    %5 = tpu.matmul %3, %4, %cst {dimension_numbers = #tpu.dot_dimension_numbers<[1], [0], [0], [1], [0, 0, 1, 1], [], []>} : vector<8x128xf32>, vector<128x384xf32>, vector<8x384xf32> -> vector<8x384xf32>
    %c0_4 = arith.constant 0 : index
    %c0_5 = arith.constant 0 : index
    %c0_6 = arith.constant 0 : index
    %6 = vector.load %arg7[%c0_4, %c0_5, %c0_6] : memref<1x8x8xf32, #tpu.memory_space<vmem>>, vector<1x8x8xf32>
    %7 = vector.shape_cast %6 : vector<1x8x8xf32> to vector<8x8xf32>
    %c0_7 = arith.constant 0 : index
    %c0_8 = arith.constant 0 : index
    %c0_9 = arith.constant 0 : index
    %8 = vector.load %arg8[%c0_7, %c0_8, %c0_9] : memref<1x8x8xf32, #tpu.memory_space<vmem>>, vector<1x8x8xf32>
    %9 = vector.shape_cast %8 : vector<1x8x8xf32> to vector<8x8xf32>
    %10 = vector.extract_strided_slice %5 {offsets = [0, 0], sizes = [8, 16], strides = [1, 1]} : vector<8x384xf32> to vector<8x16xf32>
    %11 = vector.extract_strided_slice %5 {offsets = [0, 16], sizes = [8, 16], strides = [1, 1]} : vector<8x384xf32> to vector<8x16xf32>
    %12 = vector.extract_strided_slice %5 {offsets = [0, 32], sizes = [8, 16], strides = [1, 1]} : vector<8x384xf32> to vector<8x16xf32>
    %cst_10 = arith.constant dense<0.000000e+00> : vector<8x8xf32>
    %13 = tpu.matmul %10, %11, %cst_10 {dimension_numbers = #tpu.dot_dimension_numbers<[1], [1], [0], [0], [0, 0, 1, 0], [], []>} : vector<8x16xf32>, vector<8x16xf32>, vector<8x8xf32> -> vector<8x8xf32>
    %14 = arith.mulf %13, %7 : vector<8x8xf32>
    %15 = arith.addf %14, %9 : vector<8x8xf32>
    %c0_11 = arith.constant 0 : index
    %c0_12 = arith.constant 0 : index
    %c0_13 = arith.constant 0 : index
    %16 = vector.load %arg6[%c0_11, %c0_12, %c0_13] : memref<8x8x8xf32, #tpu.memory_space<vmem>>, vector<1x8x8xf32>
    %17 = vector.shape_cast %16 : vector<1x8x8xf32> to vector<8x8xf32>
    %18 = arith.addf %15, %17 : vector<8x8xf32>
    %cst_14 = arith.constant dense<0xFF800000> : vector<8xf32>
    %19 = vector.multi_reduction <maximumf>, %18, %cst_14 [1] : vector<8x8xf32> to vector<8xf32>
    %20 = vector.shape_cast %19 : vector<8xf32> to vector<8x1xf32>
    %21 = vector.broadcast %20 : vector<8x1xf32> to vector<8x8xf32>
    %22 = arith.subf %18, %21 : vector<8x8xf32>
    %23 = math.exp %22 : vector<8x8xf32>
    %cst_15 = arith.constant dense<0.000000e+00> : vector<8xf32>
    %24 = vector.multi_reduction <add>, %23, %cst_15 [1] : vector<8x8xf32> to vector<8xf32>
    %25 = vector.shape_cast %24 : vector<8xf32> to vector<8x1xf32>
    %cst_16 = arith.constant dense<0.000000e+00> : vector<8x16xf32>
    %26 = tpu.matmul %23, %12, %cst_16 {dimension_numbers = #tpu.dot_dimension_numbers<[1], [0], [0], [1], [0, 0, 1, 1], [], []>} : vector<8x8xf32>, vector<8x16xf32>, vector<8x16xf32> -> vector<8x16xf32>
    %27 = tpu.reciprocal %25 : vector<8x1xf32> -> vector<8x1xf32>
    %28 = vector.broadcast %27 : vector<8x1xf32> to vector<8x16xf32>
    %29 = arith.mulf %26, %28 : vector<8x16xf32>
    %30 = vector.extract_strided_slice %5 {offsets = [0, 48], sizes = [8, 16], strides = [1, 1]} : vector<8x384xf32> to vector<8x16xf32>
    %31 = vector.extract_strided_slice %5 {offsets = [0, 64], sizes = [8, 16], strides = [1, 1]} : vector<8x384xf32> to vector<8x16xf32>
    %32 = vector.extract_strided_slice %5 {offsets = [0, 80], sizes = [8, 16], strides = [1, 1]} : vector<8x384xf32> to vector<8x16xf32>
    %cst_17 = arith.constant dense<0.000000e+00> : vector<8x8xf32>
    %33 = tpu.matmul %30, %31, %cst_17 {dimension_numbers = #tpu.dot_dimension_numbers<[1], [1], [0], [0], [0, 0, 1, 0], [], []>} : vector<8x16xf32>, vector<8x16xf32>, vector<8x8xf32> -> vector<8x8xf32>
    %34 = arith.mulf %33, %7 : vector<8x8xf32>
    %35 = arith.addf %34, %9 : vector<8x8xf32>
    %c1 = arith.constant 1 : index
    %c0_18 = arith.constant 0 : index
    %c0_19 = arith.constant 0 : index
    %36 = vector.load %arg6[%c1, %c0_18, %c0_19] : memref<8x8x8xf32, #tpu.memory_space<vmem>>, vector<1x8x8xf32>
    %37 = vector.shape_cast %36 : vector<1x8x8xf32> to vector<8x8xf32>
    %38 = arith.addf %35, %37 : vector<8x8xf32>
    %cst_20 = arith.constant dense<0xFF800000> : vector<8xf32>
    %39 = vector.multi_reduction <maximumf>, %38, %cst_20 [1] : vector<8x8xf32> to vector<8xf32>
    %40 = vector.shape_cast %39 : vector<8xf32> to vector<8x1xf32>
    %41 = vector.broadcast %40 : vector<8x1xf32> to vector<8x8xf32>
    %42 = arith.subf %38, %41 : vector<8x8xf32>
    %43 = math.exp %42 : vector<8x8xf32>
    %cst_21 = arith.constant dense<0.000000e+00> : vector<8xf32>
    %44 = vector.multi_reduction <add>, %43, %cst_21 [1] : vector<8x8xf32> to vector<8xf32>
    %45 = vector.shape_cast %44 : vector<8xf32> to vector<8x1xf32>
    %cst_22 = arith.constant dense<0.000000e+00> : vector<8x16xf32>
    %46 = tpu.matmul %43, %32, %cst_22 {dimension_numbers = #tpu.dot_dimension_numbers<[1], [0], [0], [1], [0, 0, 1, 1], [], []>} : vector<8x8xf32>, vector<8x16xf32>, vector<8x16xf32> -> vector<8x16xf32>
    %47 = tpu.reciprocal %45 : vector<8x1xf32> -> vector<8x1xf32>
    %48 = vector.broadcast %47 : vector<8x1xf32> to vector<8x16xf32>
    %49 = arith.mulf %46, %48 : vector<8x16xf32>
    %50 = vector.extract_strided_slice %5 {offsets = [0, 96], sizes = [8, 16], strides = [1, 1]} : vector<8x384xf32> to vector<8x16xf32>
    %51 = vector.extract_strided_slice %5 {offsets = [0, 112], sizes = [8, 16], strides = [1, 1]} : vector<8x384xf32> to vector<8x16xf32>
    %52 = vector.extract_strided_slice %5 {offsets = [0, 128], sizes = [8, 16], strides = [1, 1]} : vector<8x384xf32> to vector<8x16xf32>
    %cst_23 = arith.constant dense<0.000000e+00> : vector<8x8xf32>
    %53 = tpu.matmul %50, %51, %cst_23 {dimension_numbers = #tpu.dot_dimension_numbers<[1], [1], [0], [0], [0, 0, 1, 0], [], []>} : vector<8x16xf32>, vector<8x16xf32>, vector<8x8xf32> -> vector<8x8xf32>
    %54 = arith.mulf %53, %7 : vector<8x8xf32>
    %55 = arith.addf %54, %9 : vector<8x8xf32>
    %c2 = arith.constant 2 : index
    %c0_24 = arith.constant 0 : index
    %c0_25 = arith.constant 0 : index
    %56 = vector.load %arg6[%c2, %c0_24, %c0_25] : memref<8x8x8xf32, #tpu.memory_space<vmem>>, vector<1x8x8xf32>
    %57 = vector.shape_cast %56 : vector<1x8x8xf32> to vector<8x8xf32>
    %58 = arith.addf %55, %57 : vector<8x8xf32>
    %cst_26 = arith.constant dense<0xFF800000> : vector<8xf32>
    %59 = vector.multi_reduction <maximumf>, %58, %cst_26 [1] : vector<8x8xf32> to vector<8xf32>
    %60 = vector.shape_cast %59 : vector<8xf32> to vector<8x1xf32>
    %61 = vector.broadcast %60 : vector<8x1xf32> to vector<8x8xf32>
    %62 = arith.subf %58, %61 : vector<8x8xf32>
    %63 = math.exp %62 : vector<8x8xf32>
    %cst_27 = arith.constant dense<0.000000e+00> : vector<8xf32>
    %64 = vector.multi_reduction <add>, %63, %cst_27 [1] : vector<8x8xf32> to vector<8xf32>
    %65 = vector.shape_cast %64 : vector<8xf32> to vector<8x1xf32>
    %cst_28 = arith.constant dense<0.000000e+00> : vector<8x16xf32>
    %66 = tpu.matmul %63, %52, %cst_28 {dimension_numbers = #tpu.dot_dimension_numbers<[1], [0], [0], [1], [0, 0, 1, 1], [], []>} : vector<8x8xf32>, vector<8x16xf32>, vector<8x16xf32> -> vector<8x16xf32>
    %67 = tpu.reciprocal %65 : vector<8x1xf32> -> vector<8x1xf32>
    %68 = vector.broadcast %67 : vector<8x1xf32> to vector<8x16xf32>
    %69 = arith.mulf %66, %68 : vector<8x16xf32>
    %70 = vector.extract_strided_slice %5 {offsets = [0, 144], sizes = [8, 16], strides = [1, 1]} : vector<8x384xf32> to vector<8x16xf32>
    %71 = vector.extract_strided_slice %5 {offsets = [0, 160], sizes = [8, 16], strides = [1, 1]} : vector<8x384xf32> to vector<8x16xf32>
    %72 = vector.extract_strided_slice %5 {offsets = [0, 176], sizes = [8, 16], strides = [1, 1]} : vector<8x384xf32> to vector<8x16xf32>
    %cst_29 = arith.constant dense<0.000000e+00> : vector<8x8xf32>
    %73 = tpu.matmul %70, %71, %cst_29 {dimension_numbers = #tpu.dot_dimension_numbers<[1], [1], [0], [0], [0, 0, 1, 0], [], []>} : vector<8x16xf32>, vector<8x16xf32>, vector<8x8xf32> -> vector<8x8xf32>
    %74 = arith.mulf %73, %7 : vector<8x8xf32>
    %75 = arith.addf %74, %9 : vector<8x8xf32>
    %c3 = arith.constant 3 : index
    %c0_30 = arith.constant 0 : index
    %c0_31 = arith.constant 0 : index
    %76 = vector.load %arg6[%c3, %c0_30, %c0_31] : memref<8x8x8xf32, #tpu.memory_space<vmem>>, vector<1x8x8xf32>
    %77 = vector.shape_cast %76 : vector<1x8x8xf32> to vector<8x8xf32>
    %78 = arith.addf %75, %77 : vector<8x8xf32>
    %cst_32 = arith.constant dense<0xFF800000> : vector<8xf32>
    %79 = vector.multi_reduction <maximumf>, %78, %cst_32 [1] : vector<8x8xf32> to vector<8xf32>
    %80 = vector.shape_cast %79 : vector<8xf32> to vector<8x1xf32>
    %81 = vector.broadcast %80 : vector<8x1xf32> to vector<8x8xf32>
    %82 = arith.subf %78, %81 : vector<8x8xf32>
    %83 = math.exp %82 : vector<8x8xf32>
    %cst_33 = arith.constant dense<0.000000e+00> : vector<8xf32>
    %84 = vector.multi_reduction <add>, %83, %cst_33 [1] : vector<8x8xf32> to vector<8xf32>
    %85 = vector.shape_cast %84 : vector<8xf32> to vector<8x1xf32>
    %cst_34 = arith.constant dense<0.000000e+00> : vector<8x16xf32>
    %86 = tpu.matmul %83, %72, %cst_34 {dimension_numbers = #tpu.dot_dimension_numbers<[1], [0], [0], [1], [0, 0, 1, 1], [], []>} : vector<8x8xf32>, vector<8x16xf32>, vector<8x16xf32> -> vector<8x16xf32>
    %87 = tpu.reciprocal %85 : vector<8x1xf32> -> vector<8x1xf32>
    %88 = vector.broadcast %87 : vector<8x1xf32> to vector<8x16xf32>
    %89 = arith.mulf %86, %88 : vector<8x16xf32>
    %90 = vector.extract_strided_slice %5 {offsets = [0, 192], sizes = [8, 16], strides = [1, 1]} : vector<8x384xf32> to vector<8x16xf32>
    %91 = vector.extract_strided_slice %5 {offsets = [0, 208], sizes = [8, 16], strides = [1, 1]} : vector<8x384xf32> to vector<8x16xf32>
    %92 = vector.extract_strided_slice %5 {offsets = [0, 224], sizes = [8, 16], strides = [1, 1]} : vector<8x384xf32> to vector<8x16xf32>
    %cst_35 = arith.constant dense<0.000000e+00> : vector<8x8xf32>
    %93 = tpu.matmul %90, %91, %cst_35 {dimension_numbers = #tpu.dot_dimension_numbers<[1], [1], [0], [0], [0, 0, 1, 0], [], []>} : vector<8x16xf32>, vector<8x16xf32>, vector<8x8xf32> -> vector<8x8xf32>
    %94 = arith.mulf %93, %7 : vector<8x8xf32>
    %95 = arith.addf %94, %9 : vector<8x8xf32>
    %c4 = arith.constant 4 : index
    %c0_36 = arith.constant 0 : index
    %c0_37 = arith.constant 0 : index
    %96 = vector.load %arg6[%c4, %c0_36, %c0_37] : memref<8x8x8xf32, #tpu.memory_space<vmem>>, vector<1x8x8xf32>
    %97 = vector.shape_cast %96 : vector<1x8x8xf32> to vector<8x8xf32>
    %98 = arith.addf %95, %97 : vector<8x8xf32>
    %cst_38 = arith.constant dense<0xFF800000> : vector<8xf32>
    %99 = vector.multi_reduction <maximumf>, %98, %cst_38 [1] : vector<8x8xf32> to vector<8xf32>
    %100 = vector.shape_cast %99 : vector<8xf32> to vector<8x1xf32>
    %101 = vector.broadcast %100 : vector<8x1xf32> to vector<8x8xf32>
    %102 = arith.subf %98, %101 : vector<8x8xf32>
    %103 = math.exp %102 : vector<8x8xf32>
    %cst_39 = arith.constant dense<0.000000e+00> : vector<8xf32>
    %104 = vector.multi_reduction <add>, %103, %cst_39 [1] : vector<8x8xf32> to vector<8xf32>
    %105 = vector.shape_cast %104 : vector<8xf32> to vector<8x1xf32>
    %cst_40 = arith.constant dense<0.000000e+00> : vector<8x16xf32>
    %106 = tpu.matmul %103, %92, %cst_40 {dimension_numbers = #tpu.dot_dimension_numbers<[1], [0], [0], [1], [0, 0, 1, 1], [], []>} : vector<8x8xf32>, vector<8x16xf32>, vector<8x16xf32> -> vector<8x16xf32>
    %107 = tpu.reciprocal %105 : vector<8x1xf32> -> vector<8x1xf32>
    %108 = vector.broadcast %107 : vector<8x1xf32> to vector<8x16xf32>
    %109 = arith.mulf %106, %108 : vector<8x16xf32>
    %110 = vector.extract_strided_slice %5 {offsets = [0, 240], sizes = [8, 16], strides = [1, 1]} : vector<8x384xf32> to vector<8x16xf32>
    %111 = vector.extract_strided_slice %5 {offsets = [0, 256], sizes = [8, 16], strides = [1, 1]} : vector<8x384xf32> to vector<8x16xf32>
    %112 = vector.extract_strided_slice %5 {offsets = [0, 272], sizes = [8, 16], strides = [1, 1]} : vector<8x384xf32> to vector<8x16xf32>
    %cst_41 = arith.constant dense<0.000000e+00> : vector<8x8xf32>
    %113 = tpu.matmul %110, %111, %cst_41 {dimension_numbers = #tpu.dot_dimension_numbers<[1], [1], [0], [0], [0, 0, 1, 0], [], []>} : vector<8x16xf32>, vector<8x16xf32>, vector<8x8xf32> -> vector<8x8xf32>
    %114 = arith.mulf %113, %7 : vector<8x8xf32>
    %115 = arith.addf %114, %9 : vector<8x8xf32>
    %c5 = arith.constant 5 : index
    %c0_42 = arith.constant 0 : index
    %c0_43 = arith.constant 0 : index
    %116 = vector.load %arg6[%c5, %c0_42, %c0_43] : memref<8x8x8xf32, #tpu.memory_space<vmem>>, vector<1x8x8xf32>
    %117 = vector.shape_cast %116 : vector<1x8x8xf32> to vector<8x8xf32>
    %118 = arith.addf %115, %117 : vector<8x8xf32>
    %cst_44 = arith.constant dense<0xFF800000> : vector<8xf32>
    %119 = vector.multi_reduction <maximumf>, %118, %cst_44 [1] : vector<8x8xf32> to vector<8xf32>
    %120 = vector.shape_cast %119 : vector<8xf32> to vector<8x1xf32>
    %121 = vector.broadcast %120 : vector<8x1xf32> to vector<8x8xf32>
    %122 = arith.subf %118, %121 : vector<8x8xf32>
    %123 = math.exp %122 : vector<8x8xf32>
    %cst_45 = arith.constant dense<0.000000e+00> : vector<8xf32>
    %124 = vector.multi_reduction <add>, %123, %cst_45 [1] : vector<8x8xf32> to vector<8xf32>
    %125 = vector.shape_cast %124 : vector<8xf32> to vector<8x1xf32>
    %cst_46 = arith.constant dense<0.000000e+00> : vector<8x16xf32>
    %126 = tpu.matmul %123, %112, %cst_46 {dimension_numbers = #tpu.dot_dimension_numbers<[1], [0], [0], [1], [0, 0, 1, 1], [], []>} : vector<8x8xf32>, vector<8x16xf32>, vector<8x16xf32> -> vector<8x16xf32>
    %127 = tpu.reciprocal %125 : vector<8x1xf32> -> vector<8x1xf32>
    %128 = vector.broadcast %127 : vector<8x1xf32> to vector<8x16xf32>
    %129 = arith.mulf %126, %128 : vector<8x16xf32>
    %130 = vector.extract_strided_slice %5 {offsets = [0, 288], sizes = [8, 16], strides = [1, 1]} : vector<8x384xf32> to vector<8x16xf32>
    %131 = vector.extract_strided_slice %5 {offsets = [0, 304], sizes = [8, 16], strides = [1, 1]} : vector<8x384xf32> to vector<8x16xf32>
    %132 = vector.extract_strided_slice %5 {offsets = [0, 320], sizes = [8, 16], strides = [1, 1]} : vector<8x384xf32> to vector<8x16xf32>
    %cst_47 = arith.constant dense<0.000000e+00> : vector<8x8xf32>
    %133 = tpu.matmul %130, %131, %cst_47 {dimension_numbers = #tpu.dot_dimension_numbers<[1], [1], [0], [0], [0, 0, 1, 0], [], []>} : vector<8x16xf32>, vector<8x16xf32>, vector<8x8xf32> -> vector<8x8xf32>
    %134 = arith.mulf %133, %7 : vector<8x8xf32>
    %135 = arith.addf %134, %9 : vector<8x8xf32>
    %c6 = arith.constant 6 : index
    %c0_48 = arith.constant 0 : index
    %c0_49 = arith.constant 0 : index
    %136 = vector.load %arg6[%c6, %c0_48, %c0_49] : memref<8x8x8xf32, #tpu.memory_space<vmem>>, vector<1x8x8xf32>
    %137 = vector.shape_cast %136 : vector<1x8x8xf32> to vector<8x8xf32>
    %138 = arith.addf %135, %137 : vector<8x8xf32>
    %cst_50 = arith.constant dense<0xFF800000> : vector<8xf32>
    %139 = vector.multi_reduction <maximumf>, %138, %cst_50 [1] : vector<8x8xf32> to vector<8xf32>
    %140 = vector.shape_cast %139 : vector<8xf32> to vector<8x1xf32>
    %141 = vector.broadcast %140 : vector<8x1xf32> to vector<8x8xf32>
    %142 = arith.subf %138, %141 : vector<8x8xf32>
    %143 = math.exp %142 : vector<8x8xf32>
    %cst_51 = arith.constant dense<0.000000e+00> : vector<8xf32>
    %144 = vector.multi_reduction <add>, %143, %cst_51 [1] : vector<8x8xf32> to vector<8xf32>
    %145 = vector.shape_cast %144 : vector<8xf32> to vector<8x1xf32>
    %cst_52 = arith.constant dense<0.000000e+00> : vector<8x16xf32>
    %146 = tpu.matmul %143, %132, %cst_52 {dimension_numbers = #tpu.dot_dimension_numbers<[1], [0], [0], [1], [0, 0, 1, 1], [], []>} : vector<8x8xf32>, vector<8x16xf32>, vector<8x16xf32> -> vector<8x16xf32>
    %147 = tpu.reciprocal %145 : vector<8x1xf32> -> vector<8x1xf32>
    %148 = vector.broadcast %147 : vector<8x1xf32> to vector<8x16xf32>
    %149 = arith.mulf %146, %148 : vector<8x16xf32>
    %150 = vector.extract_strided_slice %5 {offsets = [0, 336], sizes = [8, 16], strides = [1, 1]} : vector<8x384xf32> to vector<8x16xf32>
    %151 = vector.extract_strided_slice %5 {offsets = [0, 352], sizes = [8, 16], strides = [1, 1]} : vector<8x384xf32> to vector<8x16xf32>
    %152 = vector.extract_strided_slice %5 {offsets = [0, 368], sizes = [8, 16], strides = [1, 1]} : vector<8x384xf32> to vector<8x16xf32>
    %cst_53 = arith.constant dense<0.000000e+00> : vector<8x8xf32>
    %153 = tpu.matmul %150, %151, %cst_53 {dimension_numbers = #tpu.dot_dimension_numbers<[1], [1], [0], [0], [0, 0, 1, 0], [], []>} : vector<8x16xf32>, vector<8x16xf32>, vector<8x8xf32> -> vector<8x8xf32>
    %154 = arith.mulf %153, %7 : vector<8x8xf32>
    %155 = arith.addf %154, %9 : vector<8x8xf32>
    %c7 = arith.constant 7 : index
    %c0_54 = arith.constant 0 : index
    %c0_55 = arith.constant 0 : index
    %156 = vector.load %arg6[%c7, %c0_54, %c0_55] : memref<8x8x8xf32, #tpu.memory_space<vmem>>, vector<1x8x8xf32>
    %157 = vector.shape_cast %156 : vector<1x8x8xf32> to vector<8x8xf32>
    %158 = arith.addf %155, %157 : vector<8x8xf32>
    %cst_56 = arith.constant dense<0xFF800000> : vector<8xf32>
    %159 = vector.multi_reduction <maximumf>, %158, %cst_56 [1] : vector<8x8xf32> to vector<8xf32>
    %160 = vector.shape_cast %159 : vector<8xf32> to vector<8x1xf32>
    %161 = vector.broadcast %160 : vector<8x1xf32> to vector<8x8xf32>
    %162 = arith.subf %158, %161 : vector<8x8xf32>
    %163 = math.exp %162 : vector<8x8xf32>
    %cst_57 = arith.constant dense<0.000000e+00> : vector<8xf32>
    %164 = vector.multi_reduction <add>, %163, %cst_57 [1] : vector<8x8xf32> to vector<8xf32>
    %165 = vector.shape_cast %164 : vector<8xf32> to vector<8x1xf32>
    %cst_58 = arith.constant dense<0.000000e+00> : vector<8x16xf32>
    %166 = tpu.matmul %163, %152, %cst_58 {dimension_numbers = #tpu.dot_dimension_numbers<[1], [0], [0], [1], [0, 0, 1, 1], [], []>} : vector<8x8xf32>, vector<8x16xf32>, vector<8x16xf32> -> vector<8x16xf32>
    %167 = tpu.reciprocal %165 : vector<8x1xf32> -> vector<8x1xf32>
    %168 = vector.broadcast %167 : vector<8x1xf32> to vector<8x16xf32>
    %169 = arith.mulf %166, %168 : vector<8x16xf32>
    %170 = tpu.concatenate %29, %49, %69, %89, %109, %129, %149, %169 in 1 : vector<8x16xf32>, vector<8x16xf32>, vector<8x16xf32>, vector<8x16xf32>, vector<8x16xf32>, vector<8x16xf32>, vector<8x16xf32>, vector<8x16xf32> -> vector<8x128xf32>
    %c0_59 = arith.constant 0 : index
    %c0_60 = arith.constant 0 : index
    %171 = vector.load %arg11[%c0_59, %c0_60] : memref<8x128xf32, #tpu.memory_space<vmem>>, vector<8x128xf32>
    %c0_61 = arith.constant 0 : index
    %c0_62 = arith.constant 0 : index
    %c0_63 = arith.constant 0 : index
    %172 = vector.load %arg5[%c0_61, %c0_62, %c0_63] : memref<1x128x128xf32, #tpu.memory_space<vmem>>, vector<1x128x128xf32>
    %173 = vector.shape_cast %172 : vector<1x128x128xf32> to vector<128x128xf32>
    %cst_64 = arith.constant dense<0.000000e+00> : vector<8x128xf32>
    %174 = tpu.matmul %170, %173, %cst_64 {dimension_numbers = #tpu.dot_dimension_numbers<[1], [0], [0], [1], [0, 0, 1, 1], [], []>} : vector<8x128xf32>, vector<128x128xf32>, vector<8x128xf32> -> vector<8x128xf32>
    %175 = arith.addf %171, %174 : vector<8x128xf32>
    %c0_65 = arith.constant 0 : index
    %c0_66 = arith.constant 0 : index
    %176 = vector.load %arg11[%c0_65, %c0_66] : memref<8x128xf32, #tpu.memory_space<vmem>>, vector<8x128xf32>
    tpu.vector_store %arg11[%c0_65, %c0_66], %175 {strides = array<i32>} : memref<8x128xf32, #tpu.memory_space<vmem>>, vector<8x128xf32>,
    %c0_i32_67 = arith.constant 0 : i32
    %177 = arith.cmpi eq, %arg1, %c0_i32_67 : i32
    %178 = arith.extui %177 : i1 to i32
    %c0_i32_68 = arith.constant 0 : i32
    %179 = arith.cmpi ne, %178, %c0_i32_68 : i32
    scf.if %179 {
      %c0_69 = arith.constant 0 : index
      %c0_70 = arith.constant 0 : index
      %180 = vector.load %arg11[%c0_69, %c0_70] : memref<8x128xf32, #tpu.memory_space<vmem>>, vector<8x128xf32>
      %c0_71 = arith.constant 0 : index
      %c0_72 = arith.constant 0 : index
      %c0_73 = arith.constant 0 : index
      %181 = vector.load %arg9[%c0_71, %c0_72, %c0_73] : memref<1x8x128xf32, #tpu.memory_space<vmem>>, vector<1x8x128xf32>
      %182 = vector.shape_cast %181 : vector<1x8x128xf32> to vector<8x128xf32>
      %183 = vector.shape_cast %180 : vector<8x128xf32> to vector<1x8x128xf32>
      tpu.vector_store %arg9[%c0_71, %c0_72, %c0_73], %183 {strides = array<i32>} : memref<1x8x128xf32, #tpu.memory_space<vmem>>, vector<1x8x128xf32>,
    } else {
    }
    return
  }
  func.func @transform_0(%arg0: i32, %arg1: i32) -> (i32, i32, i32) {
    %c0_i32 = arith.constant 0 : i32
    %c0_i32_0 = arith.constant 0 : i32
    %c0_i32_1 = arith.constant 0 : i32
    return %arg0, %c0_i32, %c0_i32_0 : i32, i32, i32
  }
  func.func @transform_1(%arg0: i32, %arg1: i32) -> (i32, i32) {
    %c0_i32 = arith.constant 0 : i32
    %c0_i32_0 = arith.constant 0 : i32
    %c0_i32_1 = arith.constant 0 : i32
    return %c0_i32, %c0_i32_0 : i32, i32
  }
  func.func @transform_2(%arg0: i32, %arg1: i32) -> (i32, i32) {
    %c0_i32 = arith.constant 0 : i32
    %c0_i32_0 = arith.constant 0 : i32
    return %c0_i32, %arg1 : i32, i32
  }
  func.func @transform_3(%arg0: i32, %arg1: i32) -> (i32, i32, i32) {
    %c0_i32 = arith.constant 0 : i32
    %c0_i32_0 = arith.constant 0 : i32
    %c0_i32_1 = arith.constant 0 : i32
    return %arg1, %c0_i32, %c0_i32_0 : i32, i32, i32
  }
  func.func @transform_4(%arg0: i32, %arg1: i32) -> (i32, i32, i32) {
    %c0_i32 = arith.constant 0 : i32
    %c0_i32_0 = arith.constant 0 : i32
    %c0_i32_1 = arith.constant 0 : i32
    return %arg1, %c0_i32, %c0_i32_0 : i32, i32, i32
  }
  func.func @transform_5(%arg0: i32, %arg1: i32) -> (i32, i32, i32) {
    %c0_i32 = arith.constant 0 : i32
    %c0_i32_0 = arith.constant 0 : i32
    %c0_i32_1 = arith.constant 0 : i32
    return %arg0, %c0_i32, %c0_i32_0 : i32, i32, i32
  }
  func.func @transform_6(%arg0: i32, %arg1: i32) -> (i32, i32, i32) {
    %c0_i32 = arith.constant 0 : i32
    %c0_i32_0 = arith.constant 0 : i32
    %c0_i32_1 = arith.constant 0 : i32
    return %arg0, %c0_i32, %c0_i32_0 : i32, i32, i32
  }
  func.func @transform_7(%arg0: i32, %arg1: i32) -> (i32, i32, i32) {
    %c0_i32 = arith.constant 0 : i32
    %c0_i32_0 = arith.constant 0 : i32
    %c0_i32_1 = arith.constant 0 : i32
    return %arg0, %c0_i32, %c0_i32_0 : i32, i32, i32
  }
}

</mosaic_0001>

<llo_original>
// kernel: tpu_custom_call.1
$region0: #{tpu_custom_call.1}
  #allocation0 [shape = 'u32[]', space=smem, size = 0x4, offset = 0x4, fixed_abs, tag = 'smem constant byte address 0x4 - core index']
  #allocation1 [shape = 'u32[72,128]{1,0:T(1,128)}', space=vmem, size = 0x9000, scoped, tag = 'internal scratch']
  #allocation2 [shape = 'f32[8,128]{1,0:T(8,128)}', space=vmem, size = 0x1000, scoped, tag = 'scratch operand']
  #allocation3 [shape = 'f32[8,128]{1,0:T(8,128)}', space=vmem, size = 0x1000, scoped, tag = 'scratch operand']
  %s0 = inlined_call_operand.hbm [shape: f32[2,8,128], index: 0, kind: input, shape index: {}]
  %s1 = inlined_call_operand.hbm [shape: f32[1,128], index: 1, kind: input, shape index: {}]
  %s2 = inlined_call_operand.hbm [shape: f32[128,384], index: 2, kind: input, shape index: {}]
  %s3 = inlined_call_operand.hbm [shape: f32[1,128,128], index: 3, kind: input, shape index: {}]
  %s4 = inlined_call_operand.hbm [shape: f32[8,8,8], index: 4, kind: input, shape index: {}]
  %s5 = inlined_call_operand.hbm [shape: f32[2,8,8], index: 5, kind: input, shape index: {}]
  %s6 = inlined_call_operand.hbm [shape: f32[2,8,8], index: 6, kind: input, shape index: {}]
  %s7 = inlined_call_operand.hbm [shape: f32[2,8,128], index: 7, kind: output, shape index: {}]
  %s8 = sld [smem:[#allocation0]]
  $region97: #{tpu_custom_call.1} parent=0
    _
  %s10 = ssub.s32 1, %s8
  %s11 = scalar_select 0, %s10, %s8
  $region1: #{tpu_custom_call.1} parent=0
    #allocation4 [shape = 'u8[8192]{0}', space=vmem, size = 0x2000, scoped, tag = 'input window, operand 0']
    #allocation5 [shape = 's32[2]{0}', space=sflag, size = 0x8, scoped, tag = 'scoped memory for tpu_custom_call.1']
    #allocation6 [shape = 's32[2]{0}', space=sflag, size = 0x8, scoped, tag = 'scoped memory for tpu_custom_call.1']
    #allocation7 [shape = 'u8[512]{0}', space=vmem, size = 0x400, scoped, tag = 'input window, operand 1, single buffered']
    #allocation8 [shape = 's32[1]{0}', space=sflag, size = 0x4, scoped, tag = 'scoped memory for tpu_custom_call.1']
    #allocation9 [shape = 'u8[196608]{0}', space=vmem, size = 0x30000, scoped, tag = 'input window, operand 2, single buffered']
    #allocation10 [shape = 'u8[65536]{0}', space=vmem, size = 0x10000, scoped, tag = 'input window, operand 3, single buffered']
    #allocation11 [shape = 's32[1]{0}', space=sflag, size = 0x4, scoped, tag = 'scoped memory for tpu_custom_call.1']
    #allocation12 [shape = 'u8[32768]{0}', space=vmem, size = 0x8000, scoped, tag = 'input window, operand 4, single buffered']
    #allocation13 [shape = 'u8[8192]{0}', space=vmem, size = 0x2000, scoped, tag = 'input window, operand 5']
    #allocation14 [shape = 's32[2]{0}', space=sflag, size = 0x8, scoped, tag = 'scoped memory for tpu_custom_call.1']
    #allocation15 [shape = 'u8[8192]{0}', space=vmem, size = 0x2000, scoped, tag = 'input window, operand 6']
    #allocation16 [shape = 'u8[8192]{0}', space=vmem, size = 0x2000, scoped, tag = 'output window, operand 0']
    %12 = vsyncpa [#allocation5], 0
    %s13 = scalar_lea.sflag [#allocation5], 1
    %14 = vsyncpa %s13, 0
    %15 = vsyncpa [#allocation8], 0
    %16 = vsyncpa [#allocation11], 0
    %17 = vsyncpa [#allocation14], 0
    %s18 = scalar_lea.sflag [#allocation14], 1
    %19 = vsyncpa %s18, 0
    %20 = vsyncpa [#allocation6], 0
    %s21 = scalar_lea.sflag [#allocation6], 1
    %22 = vsyncpa %s21, 0
    loop: start=0, step=1, limit=4
    $region2: #{tpu_custom_call.1} parent=1 // loop_pre_header
      _
    $region3: #{tpu_custom_call.1} parent=1 // loop_header
      %s24 = sphi 0, %s28
      %p25 = scmp.ge.s32.totalorder %s24, 4
      %s31 = sphi 0, %s43
      %s32 = sphi 0, %s39
      %s33 = sphi 0, %s31
      %s34 = sphi 0, %s32
      %s35 = sphi 0, %s33
      %s36 = sphi 0, %s34
      %s46 = sphi 0, %s48
      %s49 = sphi 0, %s46
      %s50 = sphi 0, %s49
      %s66 = sphi 0, %s50
      %s70 = sphi 0, %s70
      %s72 = sphi 0, %s70
      %s73 = sphi 0, %s72
      %s87 = sphi 0, %s73
      %s93 = sphi 0, %s95
      %s96 = sphi 0, %s93
      %s97 = sphi 0, %s96
      %s113 = sphi 0, %s97
      %s119 = sphi 0, %s121
      %s122 = sphi 0, %s119
      %s123 = sphi 0, %s122
      %s139 = sphi 0, %s123
      %s145 = sphi 0, %s147
      %s148 = sphi 0, %s145
      %s149 = sphi 0, %s148
      %s165 = sphi 0, %s149
      %s171 = sphi 0, %s173
      %s174 = sphi 0, %s171
      %s175 = sphi 0, %s174
      %s191 = sphi 0, %s175
      %s197 = sphi 0, %s199
      %s200 = sphi 0, %s197
      %s201 = sphi 0, %s200
      %s217 = sphi 0, %s201
      %s223 = sphi 0, %s225
      %s226 = sphi 0, %s223
      %s227 = sphi 0, %s226
      %s243 = sphi 0, %s227
    $region4: #{tpu_custom_call.1} parent=1 // loop_header_branch
      %27 = sbr.rel (%p25) target = $region8
    $region5: #{tpu_custom_call.1} parent=1 // loop_body
      %s29 = ssub.s32 %s24, 1
      %s30 = ssub.s32 %s24, 2
      %s37 = sadd.s32 1, %s32
      %p38 = scmp.ge.s32.totalorder %s37, 1
      %s39 = scalar_select %p38, 0, %s37
      %s40 = sadd.s32 1, %s31
      %s41 = scalar_select %p38, %s40, %s31
      %p42 = scmp.ge.s32.totalorder %s41, 2
      %s43 = scalar_select %p42, 0, %s41
      %s44 = ssub.s32 %s31, %s43
      %p45 = scmp.eq.s32.totalorder %s44, 0
      %s47 = sadd.s32 %s46, 1
      %s48 = scalar_select %p45, %s46, %s47
      %p51 = pneg %p45
      %p52 = scmp.eq.s32.totalorder %s24, 1
      %p53 = por %p51, %p52
      %p54 = scmp.ne.s32.totalorder %s46, %s49
      %p55 = scmp.eq.s32.totalorder %s24, 0
      %p56 = por %p54, %p55
      %p57 = scmp.ne.s32.totalorder %s46, %s49
      %p58 = scmp.eq.s32.totalorder %s29, 1
      %p59 = por %p57, %p58
      %p60 = scmp.ne.s32.totalorder %s49, %s50
      %p61 = scmp.eq.s32.totalorder %s29, 0
      %p62 = por %p60, %p61
      %p63 = scmp.ne.s32.totalorder %s49, %s50
      %p64 = scmp.eq.s32.totalorder %s30, 1
      %p65 = por %p63, %p64
      %p67 = scmp.ne.s32.totalorder %s50, %s66
      %p68 = scmp.eq.s32.totalorder %s30, 0
      %p69 = por %p67, %p68
      %s71 = sadd.s32 %s70, 1
      %p74 = scmp.eq.s32.totalorder %s24, 1
      %p75 = scmp.ne.s32.totalorder %s70, %s72
      %p76 = scmp.eq.s32.totalorder %s24, 0
      %p77 = por %p75, %p76
      %p78 = scmp.ne.s32.totalorder %s70, %s72
      %p79 = scmp.eq.s32.totalorder %s29, 1
      %p80 = por %p78, %p79
      %p81 = scmp.ne.s32.totalorder %s72, %s73
      %p82 = scmp.eq.s32.totalorder %s29, 0
      %p83 = por %p81, %p82
      %p84 = scmp.ne.s32.totalorder %s72, %s73
      %p85 = scmp.eq.s32.totalorder %s30, 1
      %p86 = por %p84, %p85
      %p88 = scmp.ne.s32.totalorder %s73, %s87
      %p89 = scmp.eq.s32.totalorder %s30, 0
      %p90 = por %p88, %p89
      %s91 = ssub.s32 %s32, %s39
      %p92 = scmp.eq.s32.totalorder %s91, 0
      %s94 = sadd.s32 %s93, 1
      %s95 = scalar_select %p92, %s93, %s94
      %p98 = pneg %p92
      %p99 = scmp.eq.s32.totalorder %s24, 1
      %p100 = por %p98, %p99
      %p101 = scmp.ne.s32.totalorder %s93, %s96
      %p102 = scmp.eq.s32.totalorder %s24, 0
      %p103 = por %p101, %p102
      %p104 = scmp.ne.s32.totalorder %s93, %s96
      %p105 = scmp.eq.s32.totalorder %s29, 1
      %p106 = por %p104, %p105
      %p107 = scmp.ne.s32.totalorder %s96, %s97
      %p108 = scmp.eq.s32.totalorder %s29, 0
      %p109 = por %p107, %p108
      %p110 = scmp.ne.s32.totalorder %s96, %s97
      %p111 = scmp.eq.s32.totalorder %s30, 1
      %p112 = por %p110, %p111
      %p114 = scmp.ne.s32.totalorder %s97, %s113
      %p115 = scmp.eq.s32.totalorder %s30, 0
      %p116 = por %p114, %p115
      %s117 = ssub.s32 %s32, %s39
      %p118 = scmp.eq.s32.totalorder %s117, 0
      %s120 = sadd.s32 %s119, 1
      %s121 = scalar_select %p118, %s119, %s120
      %p124 = pneg %p118
      %p125 = scmp.eq.s32.totalorder %s24, 1
      %p126 = por %p124, %p125
      %p127 = scmp.ne.s32.totalorder %s119, %s122
      %p128 = scmp.eq.s32.totalorder %s24, 0
      %p129 = por %p127, %p128
      %p130 = scmp.ne.s32.totalorder %s119, %s122
      %p131 = scmp.eq.s32.totalorder %s29, 1
      %p132 = por %p130, %p131
      %p133 = scmp.ne.s32.totalorder %s122, %s123
      %p134 = scmp.eq.s32.totalorder %s29, 0
      %p135 = por %p133, %p134
      %p136 = scmp.ne.s32.totalorder %s122, %s123
      %p137 = scmp.eq.s32.totalorder %s30, 1
      %p138 = por %p136, %p137
      %p140 = scmp.ne.s32.totalorder %s123, %s139
      %p141 = scmp.eq.s32.totalorder %s30, 0
      %p142 = por %p140, %p141
      %s143 = ssub.s32 %s32, %s39
      %p144 = scmp.eq.s32.totalorder %s143, 0
      %s146 = sadd.s32 %s145, 1
      %s147 = scalar_select %p144, %s145, %s146
      %p150 = pneg %p144
      %p151 = scmp.eq.s32.totalorder %s24, 1
      %p152 = por %p150, %p151
      %p153 = scmp.ne.s32.totalorder %s145, %s148
      %p154 = scmp.eq.s32.totalorder %s24, 0
      %p155 = por %p153, %p154
      %p156 = scmp.ne.s32.totalorder %s145, %s148
      %p157 = scmp.eq.s32.totalorder %s29, 1
      %p158 = por %p156, %p157
      %p159 = scmp.ne.s32.totalorder %s148, %s149
      %p160 = scmp.eq.s32.totalorder %s29, 0
      %p161 = por %p159, %p160
      %p162 = scmp.ne.s32.totalorder %s148, %s149
      %p163 = scmp.eq.s32.totalorder %s30, 1
      %p164 = por %p162, %p163
      %p166 = scmp.ne.s32.totalorder %s149, %s165
      %p167 = scmp.eq.s32.totalorder %s30, 0
      %p168 = por %p166, %p167
      %s169 = ssub.s32 %s31, %s43
      %p170 = scmp.eq.s32.totalorder %s169, 0
      %s172 = sadd.s32 %s171, 1
      %s173 = scalar_select %p170, %s171, %s172
      %p176 = pneg %p170
      %p177 = scmp.eq.s32.totalorder %s24, 1
      %p178 = por %p176, %p177
      %p179 = scmp.ne.s32.totalorder %s171, %s174
      %p180 = scmp.eq.s32.totalorder %s24, 0
      %p181 = por %p179, %p180
      %p182 = scmp.ne.s32.totalorder %s171, %s174
      %p183 = scmp.eq.s32.totalorder %s29, 1
      %p184 = por %p182, %p183
      %p185 = scmp.ne.s32.totalorder %s174, %s175
      %p186 = scmp.eq.s32.totalorder %s29, 0
      %p187 = por %p185, %p186
      %p188 = scmp.ne.s32.totalorder %s174, %s175
      %p189 = scmp.eq.s32.totalorder %s30, 1
      %p190 = por %p188, %p189
      %p192 = scmp.ne.s32.totalorder %s175, %s191
      %p193 = scmp.eq.s32.totalorder %s30, 0
      %p194 = por %p192, %p193
      %s195 = ssub.s32 %s31, %s43
      %p196 = scmp.eq.s32.totalorder %s195, 0
      %s198 = sadd.s32 %s197, 1
      %s199 = scalar_select %p196, %s197, %s198
      %p202 = pneg %p196
      %p203 = scmp.eq.s32.totalorder %s24, 1
      %p204 = por %p202, %p203
      %p205 = scmp.ne.s32.totalorder %s197, %s200
      %p206 = scmp.eq.s32.totalorder %s24, 0
      %p207 = por %p205, %p206
      %p208 = scmp.ne.s32.totalorder %s197, %s200
      %p209 = scmp.eq.s32.totalorder %s29, 1
      %p210 = por %p208, %p209
      %p211 = scmp.ne.s32.totalorder %s200, %s201
      %p212 = scmp.eq.s32.totalorder %s29, 0
      %p213 = por %p211, %p212
      %p214 = scmp.ne.s32.totalorder %s200, %s201
      %p215 = scmp.eq.s32.totalorder %s30, 1
      %p216 = por %p214, %p215
      %p218 = scmp.ne.s32.totalorder %s201, %s217
      %p219 = scmp.eq.s32.totalorder %s30, 0
      %p220 = por %p218, %p219
      %s221 = ssub.s32 %s31, %s43
      %p222 = scmp.eq.s32.totalorder %s221, 0
      %s224 = sadd.s32 %s223, 1
      %s225 = scalar_select %p222, %s223, %s224
      %p228 = pneg %p222
      %p229 = scmp.eq.s32.totalorder %s24, 1
      %p230 = por %p228, %p229
      %p231 = scmp.ne.s32.totalorder %s223, %s226
      %p232 = scmp.eq.s32.totalorder %s24, 0
      %p233 = por %p231, %p232
      %p234 = scmp.ne.s32.totalorder %s223, %s226
      %p235 = scmp.eq.s32.totalorder %s29, 1
      %p236 = por %p234, %p235
      %p237 = scmp.ne.s32.totalorder %s226, %s227
      %p238 = scmp.eq.s32.totalorder %s29, 0
      %p239 = por %p237, %p238
      %p240 = scmp.ne.s32.totalorder %s226, %s227
      %p241 = scmp.eq.s32.totalorder %s30, 1
      %p242 = por %p240, %p241
      %p244 = scmp.ne.s32.totalorder %s227, %s243
      %p245 = scmp.eq.s32.totalorder %s30, 0
      %p246 = por %p244, %p245
      %p247 = scmp.le.s32.totalorder 1, %s24
      %p248 = scmp.lt.s32.totalorder %s24, 3
      %p249 = pnand %p247, %p248
      %p250 = pneg %p249
      // Predicated region
      $region9: #{tpu_custom_call.1} parent=5 // pred_check
        _
      $region10: #{tpu_custom_call.1} parent=5 // pred_check_branch
        %252 = sbr.rel (%p249) target = $region12
      $region11: #{tpu_custom_call.1} parent=5 // pred_region
        %s253 = ssub.s32 %s24, 1
        // Predicated region
        $region13: #{tpu_custom_call.1} parent=11 // pred_check
          %p254 = pneg %p83
        $region14: #{tpu_custom_call.1} parent=11 // pred_check_branch
          %256 = sbr.rel (%p254) target = $region16
        $region15: #{tpu_custom_call.1} parent=11 // pred_region
          %258 = vsyncadd [#allocation8], 0
          %s260 = sshll.u32 %s1, 4
          %s261 = int_to_ptr.hbm [resolvable:$true] %s260
          %s262 = sshll.u32 [#allocation7], 4
          %s263 = int_to_ptr.vmem [resolvable:$true] %s262
          %265 = dma.hbm_to_vmem [thread:$0]  %s261, 16, %s263, [#allocation8]
        $region16: #{tpu_custom_call.1} parent=11 // pred_fallthru
          _
        // Predicated region
        $region17: #{tpu_custom_call.1} parent=11 // pred_check
          %p266 = pneg %p109
        $region18: #{tpu_custom_call.1} parent=11 // pred_check_branch
          %268 = sbr.rel (%p266) target = $region20
        $region19: #{tpu_custom_call.1} parent=11 // pred_region
          %s269 = smul.u32 3, %s34
          %271 = vsyncadd [#allocation8], 0
          %s272 = smul.addr %s269, 8
          %s273 = scalar_lea.hbm %s2, %s272
          %s274 = sshll.u32 %s273, 4
          %s275 = int_to_ptr.hbm [resolvable:$true] %s274
          %s276 = sshll.u32 [#allocation9], 4
          %s277 = int_to_ptr.vmem [resolvable:$true] %s276
          %282 = dma.hbm_to_vmem [thread:$0]  %s275, 6144, %s277, [#allocation8], 384, 384, 24
        $region20: #{tpu_custom_call.1} parent=11 // pred_fallthru
          _
        // Predicated region
        $region21: #{tpu_custom_call.1} parent=11 // pred_check
          %p283 = pneg %p135
        $region22: #{tpu_custom_call.1} parent=11 // pred_check_branch
          %285 = sbr.rel (%p283) target = $region24
        $region23: #{tpu_custom_call.1} parent=11 // pred_region
          %287 = vsyncadd [#allocation11], 0
          %s288 = smul.addr %s34, 16
          %s289 = smul.addr %s288, 8
          %s290 = scalar_lea.hbm %s3, %s289
          %s291 = sshll.u32 %s290, 4
          %s292 = int_to_ptr.hbm [resolvable:$true] %s291
          %s293 = sshll.u32 [#allocation10], 4
          %s294 = int_to_ptr.vmem [resolvable:$true] %s293
          %299 = dma.hbm_to_vmem [thread:$0]  %s292, 2048, %s294, [#allocation11], 128, 128, 8
        $region24: #{tpu_custom_call.1} parent=11 // pred_fallthru
          _
        // Predicated region
        $region25: #{tpu_custom_call.1} parent=11 // pred_check
          %p300 = pneg %p161
        $region26: #{tpu_custom_call.1} parent=11 // pred_check_branch
          %302 = sbr.rel (%p300) target = $region28
        $region27: #{tpu_custom_call.1} parent=11 // pred_region
          %s303 = smul.u32 8, %s34
          %305 = vsyncadd [#allocation11], 0
          %s306 = smul.addr %s303, 8
          %s307 = scalar_lea.hbm %s4, %s306
          %s308 = sshll.u32 %s307, 4
          %s309 = int_to_ptr.hbm [resolvable:$true] %s308
          %s310 = sshll.u32 [#allocation12], 4
          %s311 = int_to_ptr.vmem [resolvable:$true] %s310
          %316 = dma.hbm_to_vmem [thread:$0]  %s309, 1024, %s311, [#allocation11], 128, 128, 8
        $region28: #{tpu_custom_call.1} parent=11 // pred_fallthru
          _
      $region12: #{tpu_custom_call.1} parent=5 // pred_fallthru
        _
      %p317 = scmp.lt.s32.totalorder %s24, 2
      // Predicated region
      $region29: #{tpu_custom_call.1} parent=5 // pred_check
        %p318 = pneg %p317
      $region30: #{tpu_custom_call.1} parent=5 // pred_check_branch
        %320 = sbr.rel (%p318) target = $region32
      $region31: #{tpu_custom_call.1} parent=5 // pred_region
        // Predicated region
        $region33: #{tpu_custom_call.1} parent=31 // pred_check
          %p321 = pneg %p56
        $region34: #{tpu_custom_call.1} parent=31 // pred_check_branch
          %323 = sbr.rel (%p321) target = $region36
        $region35: #{tpu_custom_call.1} parent=31 // pred_region
          %s324 = sand.u32 %s46, 1
          %s325 = scalar_lea.sflag [#allocation5], %s324
          %s326 = sand.u32 %s46, 1
          %s327 = smul.addr %s326, 8
          %s328 = scalar_lea.vmem [#allocation4], %s327
          %330 = vsyncadd %s325, 0
          %s331 = smul.addr %s31, 8
          %s332 = scalar_lea.hbm %s0, %s331
          %s334 = sshll.u32 %s332, 4
          %s335 = int_to_ptr.hbm [resolvable:$true] %s334
          %s336 = sshll.u32 %s328, 4
          %s337 = int_to_ptr.vmem [resolvable:$true] %s336
          %339 = dma.hbm_to_vmem [thread:$0]  %s335, 128, %s337, %s325
        $region36: #{tpu_custom_call.1} parent=31 // pred_fallthru
          _
        // Predicated region
        $region37: #{tpu_custom_call.1} parent=31 // pred_check
          %p340 = pneg %p181
        $region38: #{tpu_custom_call.1} parent=31 // pred_check_branch
          %342 = sbr.rel (%p340) target = $region40
        $region39: #{tpu_custom_call.1} parent=31 // pred_region
          %s343 = sand.u32 %s24, 1
          %s344 = scalar_lea.sflag [#allocation14], %s343
          %s345 = sand.u32 %s171, 1
          %s346 = smul.addr %s345, 8
          %s347 = scalar_lea.vmem [#allocation13], %s346
          %349 = vsyncadd %s344, 0
          %s350 = smul.addr %s31, 8
          %s351 = scalar_lea.hbm %s5, %s350
          %s353 = sshll.u32 %s351, 4
          %s354 = int_to_ptr.hbm [resolvable:$true] %s353
          %s355 = sshll.u32 %s347, 4
          %s356 = int_to_ptr.vmem [resolvable:$true] %s355
          %358 = dma.hbm_to_vmem [thread:$0]  %s354, 128, %s356, %s344
        $region40: #{tpu_custom_call.1} parent=31 // pred_fallthru
          _
        // Predicated region
        $region41: #{tpu_custom_call.1} parent=31 // pred_check
          %p359 = pneg %p207
        $region42: #{tpu_custom_call.1} parent=31 // pred_check_branch
          %361 = sbr.rel (%p359) target = $region44
        $region43: #{tpu_custom_call.1} parent=31 // pred_region
          %s362 = sand.u32 %s24, 1
          %s363 = scalar_lea.sflag [#allocation14], %s362
          %s364 = sand.u32 %s197, 1
          %s365 = smul.addr %s364, 8
          %s366 = scalar_lea.vmem [#allocation15], %s365
          %368 = vsyncadd %s363, 0
          %s369 = smul.addr %s31, 8
          %s370 = scalar_lea.hbm %s6, %s369
          %s372 = sshll.u32 %s370, 4
          %s373 = int_to_ptr.hbm [resolvable:$true] %s372
          %s374 = sshll.u32 %s366, 4
          %s375 = int_to_ptr.vmem [resolvable:$true] %s374
          %377 = dma.hbm_to_vmem [thread:$0]  %s373, 128, %s375, %s363
        $region44: #{tpu_custom_call.1} parent=31 // pred_fallthru
          _
      $region32: #{tpu_custom_call.1} parent=5 // pred_fallthru
        _
      %p378 = scmp.le.s32.totalorder 1, %s24
      %p379 = scmp.lt.s32.totalorder %s24, 3
      %p380 = pnand %p378, %p379
      %p381 = pneg %p380
      // Predicated region
      $region45: #{tpu_custom_call.1} parent=5 // pred_check
        _
      $region46: #{tpu_custom_call.1} parent=5 // pred_check_branch
        %383 = sbr.rel (%p380) target = $region48
      $region47: #{tpu_custom_call.1} parent=5 // pred_region
        %s384 = ssub.s32 %s24, 1
        %s385 = sand.u32 %s49, 1
        %s386 = scalar_lea.sflag [#allocation5], %s385
        %s387 = sand.u32 %s49, 1
        %s388 = smul.addr %s387, 8
        %s389 = scalar_lea.vmem [#allocation4], %s388
        // Predicated region
        $region49: #{tpu_custom_call.1} parent=47 // pred_check
          %p390 = pneg %p62
        $region50: #{tpu_custom_call.1} parent=47 // pred_check_branch
          %392 = sbr.rel (%p390) target = $region52
        $region51: #{tpu_custom_call.1} parent=47 // pred_region
          %394 = dma.done %s386, 128
        $region52: #{tpu_custom_call.1} parent=47 // pred_fallthru
          _
        // Predicated region
        $region53: #{tpu_custom_call.1} parent=47 // pred_check
          %p395 = pneg %p83
        $region54: #{tpu_custom_call.1} parent=47 // pred_check_branch
          %397 = sbr.rel (%p395) target = $region56
        $region55: #{tpu_custom_call.1} parent=47 // pred_region
          %399 = dma.done [#allocation8], 16
        $region56: #{tpu_custom_call.1} parent=47 // pred_fallthru
          _
        // Predicated region
        $region57: #{tpu_custom_call.1} parent=47 // pred_check
          %p400 = pneg %p109
        $region58: #{tpu_custom_call.1} parent=47 // pred_check_branch
          %402 = sbr.rel (%p400) target = $region60
        $region59: #{tpu_custom_call.1} parent=47 // pred_region
          %404 = dma.done [#allocation8], 6144
        $region60: #{tpu_custom_call.1} parent=47 // pred_fallthru
          _
        // Predicated region
        $region61: #{tpu_custom_call.1} parent=47 // pred_check
          %p405 = pneg %p135
        $region62: #{tpu_custom_call.1} parent=47 // pred_check_branch
          %407 = sbr.rel (%p405) target = $region64
        $region63: #{tpu_custom_call.1} parent=47 // pred_region
          %409 = dma.done [#allocation11], 2048
        $region64: #{tpu_custom_call.1} parent=47 // pred_fallthru
          _
        // Predicated region
        $region65: #{tpu_custom_call.1} parent=47 // pred_check
          %p410 = pneg %p161
        $region66: #{tpu_custom_call.1} parent=47 // pred_check_branch
          %412 = sbr.rel (%p410) target = $region68
        $region67: #{tpu_custom_call.1} parent=47 // pred_region
          %414 = dma.done [#allocation11], 1024
        $region68: #{tpu_custom_call.1} parent=47 // pred_fallthru
          _
        %s415 = sand.u32 %s29, 1
        %s416 = scalar_lea.sflag [#allocation14], %s415
        %s417 = sand.u32 %s174, 1
        %s418 = smul.addr %s417, 8
        %s419 = scalar_lea.vmem [#allocation13], %s418
        // Predicated region
        $region69: #{tpu_custom_call.1} parent=47 // pred_check
          %p420 = pneg %p187
        $region70: #{tpu_custom_call.1} parent=47 // pred_check_branch
          %422 = sbr.rel (%p420) target = $region72
        $region71: #{tpu_custom_call.1} parent=47 // pred_region
          %424 = dma.done %s416, 128
        $region72: #{tpu_custom_call.1} parent=47 // pred_fallthru
          _
        %s425 = sand.u32 %s29, 1
        %s426 = scalar_lea.sflag [#allocation14], %s425
        %s427 = sand.u32 %s200, 1
        %s428 = smul.addr %s427, 8
        %s429 = scalar_lea.vmem [#allocation15], %s428
        // Predicated region
        $region73: #{tpu_custom_call.1} parent=47 // pred_check
          %p430 = pneg %p213
        $region74: #{tpu_custom_call.1} parent=47 // pred_check_branch
          %432 = sbr.rel (%p430) target = $region76
        $region75: #{tpu_custom_call.1} parent=47 // pred_region
          %434 = dma.done %s426, 128
        $region76: #{tpu_custom_call.1} parent=47 // pred_fallthru
          _
        %s435 = sand.u32 %s49, 1
        %s436 = scalar_lea.sflag [#allocation5], %s435
        %s437 = sand.u32 %s49, 1
        %s438 = smul.addr %s437, 8
        %s439 = scalar_lea.vmem [#allocation4], %s438
        %p440 = pneg %p62
        %p441 = pneg %p59
        %p442 = pneg %p83
        %p443 = pneg %p80
        %p444 = pneg %p109
        %p445 = pneg %p106
        %p446 = pneg %p135
        %p447 = pneg %p132
        %p448 = pneg %p161
        %p449 = pneg %p158
        %s450 = sand.u32 %s29, 1
        %s451 = scalar_lea.sflag [#allocation14], %s450
        %s452 = sand.u32 %s174, 1
        %s453 = smul.addr %s452, 8
        %s454 = scalar_lea.vmem [#allocation13], %s453
        %p455 = pneg %p187
        %p456 = pneg %p184
        %s457 = sand.u32 %s29, 1
        %s458 = scalar_lea.sflag [#allocation14], %s457
        %s459 = sand.u32 %s200, 1
        %s460 = smul.addr %s459, 8
        %s461 = scalar_lea.vmem [#allocation15], %s460
        %p462 = pneg %p213
        %p463 = pneg %p210
        %p464 = pneg %p239
        %p465 = pneg %p236
        %s466 = sand.u32 %s226, 1
        %s467 = scalar_lea.sflag [#allocation6], %s466
        %s468 = sand.u32 %s226, 1
        %s469 = smul.addr %s468, 8
        %s470 = scalar_lea.vmem [#allocation16], %s469
        %s471 = smul.u32 3, %s34
        %s472 = smul.u32 8, %s34
        %p473 = scmp.eq.s32.totalorder %s34, 0
        // Predicated region
        $region77: #{tpu_custom_call.1} parent=47 // pred_check
          %p474 = pneg %p473
        $region78: #{tpu_custom_call.1} parent=47 // pred_check_branch
          %476 = sbr.rel (%p474) target = $region80
        $region79: #{tpu_custom_call.1} parent=47 // pred_region
          %v477 = vld [vmem:[%s389] sm:$0xff]
          %v478 = vmul.f32 %v477, %v477
          %479 = vadd.xlane.f32.xlu0 %v478
          %v480 = vpop.xlane.xlu0 %479
          %v481 = vrcp.pop 128.0
          %v482 = vmul.f32 128.0, %v481
          %v483 = vsub.f32 1.0, %v482
          %v484 = vmul.f32 %v481, %v483
          %v485 = vadd.f32 %v481, %v484
          %vm486 = vweird.f32 %v481
          %v487 = vsel %vm486, %v481, %v485
          %v488 = vmul.f32 %v480, %v487
          %v489 = vadd.f32 %v488, 1e-06
          %v490 = vrsqrt.pop %v489
          %v491 = vmul.f32 %v490, %v489
          %v492 = vmul.f32 %v491, %v490
          %v493 = vmul.f32 0.5, %v492
          %v494 = vsub.f32 1.5, %v493
          %v495 = vmul.f32 %v490, %v494
          %vm496 = vweird.f32 %v489
          %vm497 = vweird.f32 %v490
          %vm498 = vmor %vm496, %vm497
          %v499 = vsel %vm498, %v490, %v495
          %v500 = vmul.f32 %v477, %v499
          %v501 = vld [vmem:[#allocation7] sm:$0x1]
          %v503 = vperm.slane %v501, 0
          %v505 = vmul.f32 %v503, %v500
          %506 = vst [vmem:[#allocation2] sm:$0xff] %v505
          %507 = vst [vmem:[#allocation3] sm:$0xff] %v477
        $region80: #{tpu_custom_call.1} parent=47 // pred_fallthru
          _
        %v508 = vld [vmem:[#allocation2] sm:$0xff]
        %v509 = vld [vmem:[#allocation9] sm:$0xff]
        %v510 = vld [vmem:[#allocation9 + $0x8] sm:$0xff]
        %v511 = vld [vmem:[#allocation9 + $0x10] sm:$0xff]
        %v512 = vld [vmem:[#allocation9 + $0x18] sm:$0xff]
        %v513 = vld [vmem:[#allocation9 + $0x20] sm:$0xff]
        %v514 = vld [vmem:[#allocation9 + $0x28] sm:$0xff]
        %v515 = vld [vmem:[#allocation9 + $0x30] sm:$0xff]
        %v516 = vld [vmem:[#allocation9 + $0x38] sm:$0xff]
        %v517 = vld [vmem:[#allocation9 + $0x40] sm:$0xff]
        %v518 = vld [vmem:[#allocation9 + $0x48] sm:$0xff]
        %v519 = vld [vmem:[#allocation9 + $0x50] sm:$0xff]
        %v520 = vld [vmem:[#allocation9 + $0x58] sm:$0xff]
        %v521 = vld [vmem:[#allocation9 + $0x60] sm:$0xff]
        %v522 = vld [vmem:[#allocation9 + $0x68] sm:$0xff]
        %v523 = vld [vmem:[#allocation9 + $0x70] sm:$0xff]
        %v524 = vld [vmem:[#allocation9 + $0x78] sm:$0xff]
        %v525 = vld [vmem:[#allocation9 + $0x80] sm:$0xff]
        %v526 = vld [vmem:[#allocation9 + $0x88] sm:$0xff]
        %v527 = vld [vmem:[#allocation9 + $0x90] sm:$0xff]
        %v528 = vld [vmem:[#allocation9 + $0x98] sm:$0xff]
        %v529 = vld [vmem:[#allocation9 + $0xa0] sm:$0xff]
        %v530 = vld [vmem:[#allocation9 + $0xa8] sm:$0xff]
        %v531 = vld [vmem:[#allocation9 + $0xb0] sm:$0xff]
        %v532 = vld [vmem:[#allocation9 + $0xb8] sm:$0xff]
        %v533 = vld [vmem:[#allocation9 + $0xc0] sm:$0xff]
        %v534 = vld [vmem:[#allocation9 + $0xc8] sm:$0xff]
        %v535 = vld [vmem:[#allocation9 + $0xd0] sm:$0xff]
        %v536 = vld [vmem:[#allocation9 + $0xd8] sm:$0xff]
        %v537 = vld [vmem:[#allocation9 + $0xe0] sm:$0xff]
        %v538 = vld [vmem:[#allocation9 + $0xe8] sm:$0xff]
        %v539 = vld [vmem:[#allocation9 + $0xf0] sm:$0xff]
        %v540 = vld [vmem:[#allocation9 + $0xf8] sm:$0xff]
        %v541 = vld [vmem:[#allocation9 + $0x100] sm:$0xff]
        %v542 = vld [vmem:[#allocation9 + $0x108] sm:$0xff]
        %v543 = vld [vmem:[#allocation9 + $0x110] sm:$0xff]
        %v544 = vld [vmem:[#allocation9 + $0x118] sm:$0xff]
        %v545 = vld [vmem:[#allocation9 + $0x120] sm:$0xff]
        %v546 = vld [vmem:[#allocation9 + $0x128] sm:$0xff]
        %v547 = vld [vmem:[#allocation9 + $0x130] sm:$0xff]
        %v548 = vld [vmem:[#allocation9 + $0x138] sm:$0xff]
        %v549 = vld [vmem:[#allocation9 + $0x140] sm:$0xff]
        %v550 = vld [vmem:[#allocation9 + $0x148] sm:$0xff]
        %v551 = vld [vmem:[#allocation9 + $0x150] sm:$0xff]
        %v552 = vld [vmem:[#allocation9 + $0x158] sm:$0xff]
        %v553 = vld [vmem:[#allocation9 + $0x160] sm:$0xff]
        %v554 = vld [vmem:[#allocation9 + $0x168] sm:$0xff]
        %v555 = vld [vmem:[#allocation9 + $0x170] sm:$0xff]
        %v556 = vld [vmem:[#allocation9 + $0x178] sm:$0xff]
        %557 = vmatpush.msra.mxu0 %v554
        %558 = vmatpush.msra.mxu0 %v551
        %559 = vmatpush.msra.mxu0 %v548
        %560 = vmatpush.msra.mxu0 %v545
        %561 = vmatpush.msra.mxu0 %v542
        %562 = vmatpush.msra.mxu0 %v539
        %563 = vmatpush.msra.mxu0 %v536
        %564 = vmatpush.msra.mxu0 %v533
        %565 = vmatpush.msra.mxu0 %v530
        %566 = vmatpush.msra.mxu0 %v527
        %567 = vmatpush.msra.mxu0 %v524
        %568 = vmatpush.msra.mxu0 %v521
        %569 = vmatpush.msra.mxu0 %v518
        %570 = vmatpush.msra.mxu0 %v515
        %571 = vmatpush.msra.mxu0 %v512
        %572 = vmatpush.msra.mxu0 %v509
        %573 = vmatmul.f32.gmra.mxu0 %v508
        %v574 = vpop.f32.mrf.mxu0
        %v575 = vadd.f32 0.0, %v574
        %576 = vdwg.mxu0
        %577 = vmatpush.msra.mxu0 %v555
        %578 = vmatpush.msra.mxu0 %v552
        %579 = vmatpush.msra.mxu0 %v549
        %580 = vmatpush.msra.mxu0 %v546
        %581 = vmatpush.msra.mxu0 %v543
        %582 = vmatpush.msra.mxu0 %v540
        %583 = vmatpush.msra.mxu0 %v537
        %584 = vmatpush.msra.mxu0 %v534
        %585 = vmatpush.msra.mxu0 %v531
        %586 = vmatpush.msra.mxu0 %v528
        %587 = vmatpush.msra.mxu0 %v525
        %588 = vmatpush.msra.mxu0 %v522
        %589 = vmatpush.msra.mxu0 %v519
        %590 = vmatpush.msra.mxu0 %v516
        %591 = vmatpush.msra.mxu0 %v513
        %592 = vmatpush.msra.mxu0 %v510
        %593 = vmatmul.f32.gmra.mxu0 %v508
        %v594 = vpop.f32.mrf.mxu0
        %v595 = vadd.f32 0.0, %v594
        %596 = vdwg.mxu0
        %597 = vmatpush.msra.mxu0 %v556
        %598 = vmatpush.msra.mxu0 %v553
        %599 = vmatpush.msra.mxu0 %v550
        %600 = vmatpush.msra.mxu0 %v547
        %601 = vmatpush.msra.mxu0 %v544
        %602 = vmatpush.msra.mxu0 %v541
        %603 = vmatpush.msra.mxu0 %v538
        %604 = vmatpush.msra.mxu0 %v535
        %605 = vmatpush.msra.mxu0 %v532
        %606 = vmatpush.msra.mxu0 %v529
        %607 = vmatpush.msra.mxu0 %v526
        %608 = vmatpush.msra.mxu0 %v523
        %609 = vmatpush.msra.mxu0 %v520
        %610 = vmatpush.msra.mxu0 %v517
        %611 = vmatpush.msra.mxu0 %v514
        %612 = vmatpush.msra.mxu0 %v511
        %613 = vmatmul.f32.gmra.mxu0 %v508
        %v614 = vpop.f32.mrf.mxu0
        %v615 = vadd.f32 0.0, %v614
        %616 = vdwg.mxu0
        %v617 = vld [vmem:[%s419] sm:$0xff]
        %v618 = vld [vmem:[%s429] sm:$0xff]
        %620 = vrot.lane.b32.xlu0 %v575, 112
        %v621 = vpop.permute.xlu0 %620
        %vm622 = vcmask 130048
        %v623 = vsel %vm622, %v575, 0
        %v625 = vsel %vm622, %v621, 0
        %627 = vmatpush.xpose.msra.mxu0 0.0
        %628 = vmatpush.xpose.msra.mxu0 0.0
        %629 = vmatpush.xpose.msra.mxu0 0.0
        %630 = vmatpush.xpose.msra.mxu0 0.0
        %631 = vmatpush.xpose.msra.mxu0 0.0
        %632 = vmatpush.xpose.msra.mxu0 0.0
        %633 = vmatpush.xpose.msra.mxu0 0.0
        %634 = vmatpush.xpose.msra.mxu0 0.0
        %635 = vmatpush.xpose.msra.mxu0 0.0
        %636 = vmatpush.xpose.msra.mxu0 0.0
        %637 = vmatpush.xpose.msra.mxu0 0.0
        %638 = vmatpush.xpose.msra.mxu0 0.0
        %639 = vmatpush.xpose.msra.mxu0 0.0
        %640 = vmatpush.xpose.msra.mxu0 0.0
        %641 = vmatpush.xpose.msra.mxu0 0.0
        %642 = vmatpush.xpose.msra.mxu0 %v625
        %643 = vmatmul.f32.gmra.mxu0 %v623
        %v644 = vpop.f32.mrf.mxu0
        %v645 = vadd.f32 0.0, %v644
        %646 = vdwg.mxu0
        %v647 = vmul.f32 %v645, %v617
        %v648 = vadd.f32 %v647, %v618
        %v649 = vld [vmem:[#allocation12] sm:$0xff]
        %v650 = vadd.f32 %v648, %v649
        %vm651 = vcmask 64512
        %v652 = vsel %vm651, %v650, -inf
        %653 = vmax.xlane.f32.xlu0 %v652
        %v654 = vpop.xlane.xlu0 %653
        %v655 = vsub.f32 %v650, %v654
        %v656 = vmul.f32 %v655, 1.442695
        %v657 = vpow.pop %v656
        %v658 = vsel %vm651, %v657, 0.0
        %659 = vadd.xlane.f32.xlu0 %v658
        %v660 = vpop.xlane.xlu0 %659
        %661 = vrot.lane.b32.xlu0 %v575, 96
        %v662 = vpop.permute.xlu0 %661
        %v665 = vsel %vm651, %v657, 0
        %667 = vmatpush.msra.mxu0 0.0
        %668 = vmatpush.msra.mxu0 0.0
        %669 = vmatpush.msra.mxu0 0.0
        %670 = vmatpush.msra.mxu0 0.0
        %671 = vmatpush.msra.mxu0 0.0
        %672 = vmatpush.msra.mxu0 0.0
        %673 = vmatpush.msra.mxu0 0.0
        %674 = vmatpush.msra.mxu0 0.0
        %675 = vmatpush.msra.mxu0 0.0
        %676 = vmatpush.msra.mxu0 0.0
        %677 = vmatpush.msra.mxu0 0.0
        %678 = vmatpush.msra.mxu0 0.0
        %679 = vmatpush.msra.mxu0 0.0
        %680 = vmatpush.msra.mxu0 0.0
        %681 = vmatpush.msra.mxu0 0.0
        %682 = vmatpush.msra.mxu0 %v662
        %683 = vmatmul.f32.gmra.mxu0 %v665
        %v684 = vpop.f32.mrf.mxu0
        %v685 = vadd.f32 0.0, %v684
        %686 = vdwg.mxu0
        %v687 = vrcp.pop %v660
        %v688 = vmul.f32 %v660, %v687
        %v689 = vsub.f32 1.0, %v688
        %v690 = vmul.f32 %v687, %v689
        %v691 = vadd.f32 %v687, %v690
        %vm692 = vweird.f32 %v660
        %vm693 = vweird.f32 %v687
        %vm694 = vmor %vm692, %vm693
        %v695 = vsel %vm694, %v687, %v691
        %v696 = vand.u32 2147483647, %v660
        %vm697 = vcmp.eq.f32.partialorder %v696, 8.507059e+37
        %v698 = vand.u32 %v660, 2147483648
        %v699 = vor.u32 1.1754944e-38, %v698
        %v700 = vsel %vm697, %v699, %v695
        %v701 = vmul.f32 %v685, %v700
        %702 = vrot.lane.b32.xlu0 %v575, 80
        %v703 = vpop.permute.xlu0 %702
        %704 = vrot.lane.b32.xlu0 %v575, 64
        %v705 = vpop.permute.xlu0 %704
        %v706 = vsel %vm622, %v703, 0
        %v708 = vsel %vm622, %v705, 0
        %710 = vmatpush.xpose.msra.mxu0 0.0
        %711 = vmatpush.xpose.msra.mxu0 0.0
        %712 = vmatpush.xpose.msra.mxu0 0.0
        %713 = vmatpush.xpose.msra.mxu0 0.0
        %714 = vmatpush.xpose.msra.mxu0 0.0
        %715 = vmatpush.xpose.msra.mxu0 0.0
        %716 = vmatpush.xpose.msra.mxu0 0.0
        %717 = vmatpush.xpose.msra.mxu0 0.0
        %718 = vmatpush.xpose.msra.mxu0 0.0
        %719 = vmatpush.xpose.msra.mxu0 0.0
        %720 = vmatpush.xpose.msra.mxu0 0.0
        %721 = vmatpush.xpose.msra.mxu0 0.0
        %722 = vmatpush.xpose.msra.mxu0 0.0
        %723 = vmatpush.xpose.msra.mxu0 0.0
        %724 = vmatpush.xpose.msra.mxu0 0.0
        %725 = vmatpush.xpose.msra.mxu0 %v708
        %726 = vmatmul.f32.gmra.mxu0 %v706
        %v727 = vpop.f32.mrf.mxu0
        %v728 = vadd.f32 0.0, %v727
        %729 = vdwg.mxu0
        %v730 = vmul.f32 %v728, %v617
        %v731 = vadd.f32 %v730, %v618
        %s732 = scalar_lea.vmem [#allocation12], 8
        %v733 = vld [vmem:[%s732] sm:$0xff]
        %v734 = vadd.f32 %v731, %v733
        %v735 = vsel %vm651, %v734, -inf
        %736 = vmax.xlane.f32.xlu0 %v735
        %v737 = vpop.xlane.xlu0 %736
        %v738 = vsub.f32 %v734, %v737
        %v739 = vmul.f32 %v738, 1.442695
        %v740 = vpow.pop %v739
        %v741 = vsel %vm651, %v740, 0.0
        %742 = vadd.xlane.f32.xlu0 %v741
        %v743 = vpop.xlane.xlu0 %742
        %744 = vrot.lane.b32.xlu0 %v575, 48
        %v745 = vpop.permute.xlu0 %744
        %v748 = vsel %vm651, %v740, 0
        %750 = vmatpush.msra.mxu0 0.0
        %751 = vmatpush.msra.mxu0 0.0
        %752 = vmatpush.msra.mxu0 0.0
        %753 = vmatpush.msra.mxu0 0.0
        %754 = vmatpush.msra.mxu0 0.0
        %755 = vmatpush.msra.mxu0 0.0
        %756 = vmatpush.msra.mxu0 0.0
        %757 = vmatpush.msra.mxu0 0.0
        %758 = vmatpush.msra.mxu0 0.0
        %759 = vmatpush.msra.mxu0 0.0
        %760 = vmatpush.msra.mxu0 0.0
        %761 = vmatpush.msra.mxu0 0.0
        %762 = vmatpush.msra.mxu0 0.0
        %763 = vmatpush.msra.mxu0 0.0
        %764 = vmatpush.msra.mxu0 0.0
        %765 = vmatpush.msra.mxu0 %v745
        %766 = vmatmul.f32.gmra.mxu0 %v748
        %v767 = vpop.f32.mrf.mxu0
        %v768 = vadd.f32 0.0, %v767
        %769 = vdwg.mxu0
        %v770 = vrcp.pop %v743
        %v771 = vmul.f32 %v743, %v770
        %v772 = vsub.f32 1.0, %v771
        %v773 = vmul.f32 %v770, %v772
        %v774 = vadd.f32 %v770, %v773
        %vm775 = vweird.f32 %v743
        %vm776 = vweird.f32 %v770
        %vm777 = vmor %vm775, %vm776
        %v778 = vsel %vm777, %v770, %v774
        %v779 = vand.u32 2147483647, %v743
        %vm780 = vcmp.eq.f32.partialorder %v779, 8.507059e+37
        %v781 = vand.u32 %v743, 2147483648
        %v782 = vor.u32 1.1754944e-38, %v781
        %v783 = vsel %vm780, %v782, %v778
        %v784 = vmul.f32 %v768, %v783
        %785 = vrot.lane.b32.xlu0 %v575, 32
        %v786 = vpop.permute.xlu0 %785
        %787 = vrot.lane.b32.xlu0 %v575, 16
        %v788 = vpop.permute.xlu0 %787
        %v789 = vsel %vm622, %v786, 0
        %v791 = vsel %vm622, %v788, 0
        %793 = vmatpush.xpose.msra.mxu0 0.0
        %794 = vmatpush.xpose.msra.mxu0 0.0
        %795 = vmatpush.xpose.msra.mxu0 0.0
        %796 = vmatpush.xpose.msra.mxu0 0.0
        %797 = vmatpush.xpose.msra.mxu0 0.0
        %798 = vmatpush.xpose.msra.mxu0 0.0
        %799 = vmatpush.xpose.msra.mxu0 0.0
        %800 = vmatpush.xpose.msra.mxu0 0.0
        %801 = vmatpush.xpose.msra.mxu0 0.0
        %802 = vmatpush.xpose.msra.mxu0 0.0
        %803 = vmatpush.xpose.msra.mxu0 0.0
        %804 = vmatpush.xpose.msra.mxu0 0.0
        %805 = vmatpush.xpose.msra.mxu0 0.0
        %806 = vmatpush.xpose.msra.mxu0 0.0
        %807 = vmatpush.xpose.msra.mxu0 0.0
        %808 = vmatpush.xpose.msra.mxu0 %v791
        %809 = vmatmul.f32.gmra.mxu0 %v789
        %v810 = vpop.f32.mrf.mxu0
        %v811 = vadd.f32 0.0, %v810
        %812 = vdwg.mxu0
        %v813 = vmul.f32 %v811, %v617
        %v814 = vadd.f32 %v813, %v618
        %s815 = scalar_lea.vmem [#allocation12], 16
        %v816 = vld [vmem:[%s815] sm:$0xff]
        %v817 = vadd.f32 %v814, %v816
        %v818 = vsel %vm651, %v817, -inf
        %819 = vmax.xlane.f32.xlu0 %v818
        %v820 = vpop.xlane.xlu0 %819
        %v821 = vsub.f32 %v817, %v820
        %v822 = vmul.f32 %v821, 1.442695
        %v823 = vpow.pop %v822
        %v824 = vsel %vm651, %v823, 0.0
        %825 = vadd.xlane.f32.xlu0 %v824
        %v826 = vpop.xlane.xlu0 %825
        %v828 = vsel %vm651, %v823, 0
        %830 = vmatpush.msra.mxu0 0.0
        %831 = vmatpush.msra.mxu0 0.0
        %832 = vmatpush.msra.mxu0 0.0
        %833 = vmatpush.msra.mxu0 0.0
        %834 = vmatpush.msra.mxu0 0.0
        %835 = vmatpush.msra.mxu0 0.0
        %836 = vmatpush.msra.mxu0 0.0
        %837 = vmatpush.msra.mxu0 0.0
        %838 = vmatpush.msra.mxu0 0.0
        %839 = vmatpush.msra.mxu0 0.0
        %840 = vmatpush.msra.mxu0 0.0
        %841 = vmatpush.msra.mxu0 0.0
        %842 = vmatpush.msra.mxu0 0.0
        %843 = vmatpush.msra.mxu0 0.0
        %844 = vmatpush.msra.mxu0 0.0
        %845 = vmatpush.msra.mxu0 %v595
        %846 = vmatmul.f32.gmra.mxu0 %v828
        %v847 = vpop.f32.mrf.mxu0
        %v848 = vadd.f32 0.0, %v847
        %849 = vdwg.mxu0
        %v850 = vrcp.pop %v826
        %v851 = vmul.f32 %v826, %v850
        %v852 = vsub.f32 1.0, %v851
        %v853 = vmul.f32 %v850, %v852
        %v854 = vadd.f32 %v850, %v853
        %vm855 = vweird.f32 %v826
        %vm856 = vweird.f32 %v850
        %vm857 = vmor %vm855, %vm856
        %v858 = vsel %vm857, %v850, %v854
        %v859 = vand.u32 2147483647, %v826
        %vm860 = vcmp.eq.f32.partialorder %v859, 8.507059e+37
        %v861 = vand.u32 %v826, 2147483648
        %v862 = vor.u32 1.1754944e-38, %v861
        %v863 = vsel %vm860, %v862, %v858
        %v864 = vmul.f32 %v848, %v863
        %866 = vrot.lane.b32.xlu0 %v595, 112
        %v867 = vpop.permute.xlu0 %866
        %868 = vrot.lane.b32.xlu0 %v595, 96
        %v869 = vpop.permute.xlu0 %868
        %v870 = vsel %vm622, %v867, 0
        %v872 = vsel %vm622, %v869, 0
        %874 = vmatpush.xpose.msra.mxu0 0.0
        %875 = vmatpush.xpose.msra.mxu0 0.0
        %876 = vmatpush.xpose.msra.mxu0 0.0
        %877 = vmatpush.xpose.msra.mxu0 0.0
        %878 = vmatpush.xpose.msra.mxu0 0.0
        %879 = vmatpush.xpose.msra.mxu0 0.0
        %880 = vmatpush.xpose.msra.mxu0 0.0
        %881 = vmatpush.xpose.msra.mxu0 0.0
        %882 = vmatpush.xpose.msra.mxu0 0.0
        %883 = vmatpush.xpose.msra.mxu0 0.0
        %884 = vmatpush.xpose.msra.mxu0 0.0
        %885 = vmatpush.xpose.msra.mxu0 0.0
        %886 = vmatpush.xpose.msra.mxu0 0.0
        %887 = vmatpush.xpose.msra.mxu0 0.0
        %888 = vmatpush.xpose.msra.mxu0 0.0
        %889 = vmatpush.xpose.msra.mxu0 %v872
        %890 = vmatmul.f32.gmra.mxu0 %v870
        %v891 = vpop.f32.mrf.mxu0
        %v892 = vadd.f32 0.0, %v891
        %893 = vdwg.mxu0
        %v894 = vmul.f32 %v892, %v617
        %v895 = vadd.f32 %v894, %v618
        %s896 = scalar_lea.vmem [#allocation12], 24
        %v897 = vld [vmem:[%s896] sm:$0xff]
        %v898 = vadd.f32 %v895, %v897
        %v899 = vsel %vm651, %v898, -inf
        %900 = vmax.xlane.f32.xlu0 %v899
        %v901 = vpop.xlane.xlu0 %900
        %v902 = vsub.f32 %v898, %v901
        %v903 = vmul.f32 %v902, 1.442695
        %v904 = vpow.pop %v903
        %v905 = vsel %vm651, %v904, 0.0
        %906 = vadd.xlane.f32.xlu0 %v905
        %v907 = vpop.xlane.xlu0 %906
        %908 = vrot.lane.b32.xlu0 %v595, 80
        %v909 = vpop.permute.xlu0 %908
        %v912 = vsel %vm651, %v904, 0
        %914 = vmatpush.msra.mxu0 0.0
        %915 = vmatpush.msra.mxu0 0.0
        %916 = vmatpush.msra.mxu0 0.0
        %917 = vmatpush.msra.mxu0 0.0
        %918 = vmatpush.msra.mxu0 0.0
        %919 = vmatpush.msra.mxu0 0.0
        %920 = vmatpush.msra.mxu0 0.0
        %921 = vmatpush.msra.mxu0 0.0
        %922 = vmatpush.msra.mxu0 0.0
        %923 = vmatpush.msra.mxu0 0.0
        %924 = vmatpush.msra.mxu0 0.0
        %925 = vmatpush.msra.mxu0 0.0
        %926 = vmatpush.msra.mxu0 0.0
        %927 = vmatpush.msra.mxu0 0.0
        %928 = vmatpush.msra.mxu0 0.0
        %929 = vmatpush.msra.mxu0 %v909
        %930 = vmatmul.f32.gmra.mxu0 %v912
        %v931 = vpop.f32.mrf.mxu0
        %v932 = vadd.f32 0.0, %v931
        %933 = vdwg.mxu0
        %v934 = vrcp.pop %v907
        %v935 = vmul.f32 %v907, %v934
        %v936 = vsub.f32 1.0, %v935
        %v937 = vmul.f32 %v934, %v936
        %v938 = vadd.f32 %v934, %v937
        %vm939 = vweird.f32 %v907
        %vm940 = vweird.f32 %v934
        %vm941 = vmor %vm939, %vm940
        %v942 = vsel %vm941, %v934, %v938
        %v943 = vand.u32 2147483647, %v907
        %vm944 = vcmp.eq.f32.partialorder %v943, 8.507059e+37
        %v945 = vand.u32 %v907, 2147483648
        %v946 = vor.u32 1.1754944e-38, %v945
        %v947 = vsel %vm944, %v946, %v942
        %v948 = vmul.f32 %v932, %v947
        %949 = vrot.lane.b32.xlu0 %v595, 64
        %v950 = vpop.permute.xlu0 %949
        %951 = vrot.lane.b32.xlu0 %v595, 48
        %v952 = vpop.permute.xlu0 %951
        %v953 = vsel %vm622, %v950, 0
        %v955 = vsel %vm622, %v952, 0
        %957 = vmatpush.xpose.msra.mxu0 0.0
        %958 = vmatpush.xpose.msra.mxu0 0.0
        %959 = vmatpush.xpose.msra.mxu0 0.0
        %960 = vmatpush.xpose.msra.mxu0 0.0
        %961 = vmatpush.xpose.msra.mxu0 0.0
        %962 = vmatpush.xpose.msra.mxu0 0.0
        %963 = vmatpush.xpose.msra.mxu0 0.0
        %964 = vmatpush.xpose.msra.mxu0 0.0
        %965 = vmatpush.xpose.msra.mxu0 0.0
        %966 = vmatpush.xpose.msra.mxu0 0.0
        %967 = vmatpush.xpose.msra.mxu0 0.0
        %968 = vmatpush.xpose.msra.mxu0 0.0
        %969 = vmatpush.xpose.msra.mxu0 0.0
        %970 = vmatpush.xpose.msra.mxu0 0.0
        %971 = vmatpush.xpose.msra.mxu0 0.0
        %972 = vmatpush.xpose.msra.mxu0 %v955
        %973 = vmatmul.f32.gmra.mxu0 %v953
        %v974 = vpop.f32.mrf.mxu0
        %v975 = vadd.f32 0.0, %v974
        %976 = vdwg.mxu0
        %v977 = vmul.f32 %v975, %v617
        %v978 = vadd.f32 %v977, %v618
        %s979 = scalar_lea.vmem [#allocation12], 32
        %v980 = vld [vmem:[%s979] sm:$0xff]
        %v981 = vadd.f32 %v978, %v980
        %v982 = vsel %vm651, %v981, -inf
        %983 = vmax.xlane.f32.xlu0 %v982
        %v984 = vpop.xlane.xlu0 %983
        %v985 = vsub.f32 %v981, %v984
        %v986 = vmul.f32 %v985, 1.442695
        %v987 = vpow.pop %v986
        %v988 = vsel %vm651, %v987, 0.0
        %989 = vadd.xlane.f32.xlu0 %v988
        %v990 = vpop.xlane.xlu0 %989
        %991 = vrot.lane.b32.xlu0 %v595, 32
        %v992 = vpop.permute.xlu0 %991
        %v995 = vsel %vm651, %v987, 0
        %997 = vmatpush.msra.mxu0 0.0
        %998 = vmatpush.msra.mxu0 0.0
        %999 = vmatpush.msra.mxu0 0.0
        %1000 = vmatpush.msra.mxu0 0.0
        %1001 = vmatpush.msra.mxu0 0.0
        %1002 = vmatpush.msra.mxu0 0.0
        %1003 = vmatpush.msra.mxu0 0.0
        %1004 = vmatpush.msra.mxu0 0.0
        %1005 = vmatpush.msra.mxu0 0.0
        %1006 = vmatpush.msra.mxu0 0.0
        %1007 = vmatpush.msra.mxu0 0.0
        %1008 = vmatpush.msra.mxu0 0.0
        %1009 = vmatpush.msra.mxu0 0.0
        %1010 = vmatpush.msra.mxu0 0.0
        %1011 = vmatpush.msra.mxu0 0.0
        %1012 = vmatpush.msra.mxu0 %v992
        %1013 = vmatmul.f32.gmra.mxu0 %v995
        %v1014 = vpop.f32.mrf.mxu0
        %v1015 = vadd.f32 0.0, %v1014
        %1016 = vdwg.mxu0
        %v1017 = vrcp.pop %v990
        %v1018 = vmul.f32 %v990, %v1017
        %v1019 = vsub.f32 1.0, %v1018
        %v1020 = vmul.f32 %v1017, %v1019
        %v1021 = vadd.f32 %v1017, %v1020
        %vm1022 = vweird.f32 %v990
        %vm1023 = vweird.f32 %v1017
        %vm1024 = vmor %vm1022, %vm1023
        %v1025 = vsel %vm1024, %v1017, %v1021
        %v1026 = vand.u32 2147483647, %v990
        %vm1027 = vcmp.eq.f32.partialorder %v1026, 8.507059e+37
        %v1028 = vand.u32 %v990, 2147483648
        %v1029 = vor.u32 1.1754944e-38, %v1028
        %v1030 = vsel %vm1027, %v1029, %v1025
        %v1031 = vmul.f32 %v1015, %v1030
        %1032 = vrot.lane.b32.xlu0 %v595, 16
        %v1033 = vpop.permute.xlu0 %1032
        %v1034 = vsel %vm622, %v1033, 0
        %v1037 = vsel %vm622, %v615, 0
        %1039 = vmatpush.xpose.msra.mxu0 0.0
        %1040 = vmatpush.xpose.msra.mxu0 0.0
        %1041 = vmatpush.xpose.msra.mxu0 0.0
        %1042 = vmatpush.xpose.msra.mxu0 0.0
        %1043 = vmatpush.xpose.msra.mxu0 0.0
        %1044 = vmatpush.xpose.msra.mxu0 0.0
        %1045 = vmatpush.xpose.msra.mxu0 0.0
        %1046 = vmatpush.xpose.msra.mxu0 0.0
        %1047 = vmatpush.xpose.msra.mxu0 0.0
        %1048 = vmatpush.xpose.msra.mxu0 0.0
        %1049 = vmatpush.xpose.msra.mxu0 0.0
        %1050 = vmatpush.xpose.msra.mxu0 0.0
        %1051 = vmatpush.xpose.msra.mxu0 0.0
        %1052 = vmatpush.xpose.msra.mxu0 0.0
        %1053 = vmatpush.xpose.msra.mxu0 0.0
        %1054 = vmatpush.xpose.msra.mxu0 %v1037
        %1055 = vmatmul.f32.gmra.mxu0 %v1034
        %v1056 = vpop.f32.mrf.mxu0
        %v1057 = vadd.f32 0.0, %v1056
        %1058 = vdwg.mxu0
        %v1059 = vmul.f32 %v1057, %v617
        %v1060 = vadd.f32 %v1059, %v618
        %s1061 = scalar_lea.vmem [#allocation12], 40
        %v1062 = vld [vmem:[%s1061] sm:$0xff]
        %v1063 = vadd.f32 %v1060, %v1062
        %v1064 = vsel %vm651, %v1063, -inf
        %1065 = vmax.xlane.f32.xlu0 %v1064
        %v1066 = vpop.xlane.xlu0 %1065
        %v1067 = vsub.f32 %v1063, %v1066
        %v1068 = vmul.f32 %v1067, 1.442695
        %v1069 = vpow.pop %v1068
        %v1070 = vsel %vm651, %v1069, 0.0
        %1071 = vadd.xlane.f32.xlu0 %v1070
        %v1072 = vpop.xlane.xlu0 %1071
        %1073 = vrot.lane.b32.xlu0 %v615, 112
        %v1074 = vpop.permute.xlu0 %1073
        %v1077 = vsel %vm651, %v1069, 0
        %1079 = vmatpush.msra.mxu0 0.0
        %1080 = vmatpush.msra.mxu0 0.0
        %1081 = vmatpush.msra.mxu0 0.0
        %1082 = vmatpush.msra.mxu0 0.0
        %1083 = vmatpush.msra.mxu0 0.0
        %1084 = vmatpush.msra.mxu0 0.0
        %1085 = vmatpush.msra.mxu0 0.0
        %1086 = vmatpush.msra.mxu0 0.0
        %1087 = vmatpush.msra.mxu0 0.0
        %1088 = vmatpush.msra.mxu0 0.0
        %1089 = vmatpush.msra.mxu0 0.0
        %1090 = vmatpush.msra.mxu0 0.0
        %1091 = vmatpush.msra.mxu0 0.0
        %1092 = vmatpush.msra.mxu0 0.0
        %1093 = vmatpush.msra.mxu0 0.0
        %1094 = vmatpush.msra.mxu0 %v1074
        %1095 = vmatmul.f32.gmra.mxu0 %v1077
        %v1096 = vpop.f32.mrf.mxu0
        %v1097 = vadd.f32 0.0, %v1096
        %1098 = vdwg.mxu0
        %v1099 = vrcp.pop %v1072
        %v1100 = vmul.f32 %v1072, %v1099
        %v1101 = vsub.f32 1.0, %v1100
        %v1102 = vmul.f32 %v1099, %v1101
        %v1103 = vadd.f32 %v1099, %v1102
        %vm1104 = vweird.f32 %v1072
        %vm1105 = vweird.f32 %v1099
        %vm1106 = vmor %vm1104, %vm1105
        %v1107 = vsel %vm1106, %v1099, %v1103
        %v1108 = vand.u32 2147483647, %v1072
        %vm1109 = vcmp.eq.f32.partialorder %v1108, 8.507059e+37
        %v1110 = vand.u32 %v1072, 2147483648
        %v1111 = vor.u32 1.1754944e-38, %v1110
        %v1112 = vsel %vm1109, %v1111, %v1107
        %v1113 = vmul.f32 %v1097, %v1112
        %1114 = vrot.lane.b32.xlu0 %v615, 96
        %v1115 = vpop.permute.xlu0 %1114
        %1116 = vrot.lane.b32.xlu0 %v615, 80
        %v1117 = vpop.permute.xlu0 %1116
        %v1118 = vsel %vm622, %v1115, 0
        %v1120 = vsel %vm622, %v1117, 0
        %1122 = vmatpush.xpose.msra.mxu0 0.0
        %1123 = vmatpush.xpose.msra.mxu0 0.0
        %1124 = vmatpush.xpose.msra.mxu0 0.0
        %1125 = vmatpush.xpose.msra.mxu0 0.0
        %1126 = vmatpush.xpose.msra.mxu0 0.0
        %1127 = vmatpush.xpose.msra.mxu0 0.0
        %1128 = vmatpush.xpose.msra.mxu0 0.0
        %1129 = vmatpush.xpose.msra.mxu0 0.0
        %1130 = vmatpush.xpose.msra.mxu0 0.0
        %1131 = vmatpush.xpose.msra.mxu0 0.0
        %1132 = vmatpush.xpose.msra.mxu0 0.0
        %1133 = vmatpush.xpose.msra.mxu0 0.0
        %1134 = vmatpush.xpose.msra.mxu0 0.0
        %1135 = vmatpush.xpose.msra.mxu0 0.0
        %1136 = vmatpush.xpose.msra.mxu0 0.0
        %1137 = vmatpush.xpose.msra.mxu0 %v1120
        %1138 = vmatmul.f32.gmra.mxu0 %v1118
        %v1139 = vpop.f32.mrf.mxu0
        %v1140 = vadd.f32 0.0, %v1139
        %1141 = vdwg.mxu0
        %v1142 = vmul.f32 %v1140, %v617
        %v1143 = vadd.f32 %v1142, %v618
        %s1144 = scalar_lea.vmem [#allocation12], 48
        %v1145 = vld [vmem:[%s1144] sm:$0xff]
        %v1146 = vadd.f32 %v1143, %v1145
        %v1147 = vsel %vm651, %v1146, -inf
        %1148 = vmax.xlane.f32.xlu0 %v1147
        %v1149 = vpop.xlane.xlu0 %1148
        %v1150 = vsub.f32 %v1146, %v1149
        %v1151 = vmul.f32 %v1150, 1.442695
        %v1152 = vpow.pop %v1151
        %v1153 = vsel %vm651, %v1152, 0.0
        %1154 = vadd.xlane.f32.xlu0 %v1153
        %v1155 = vpop.xlane.xlu0 %1154
        %1156 = vrot.lane.b32.xlu0 %v615, 64
        %v1157 = vpop.permute.xlu0 %1156
        %v1160 = vsel %vm651, %v1152, 0
        %1162 = vmatpush.msra.mxu0 0.0
        %1163 = vmatpush.msra.mxu0 0.0
        %1164 = vmatpush.msra.mxu0 0.0
        %1165 = vmatpush.msra.mxu0 0.0
        %1166 = vmatpush.msra.mxu0 0.0
        %1167 = vmatpush.msra.mxu0 0.0
        %1168 = vmatpush.msra.mxu0 0.0
        %1169 = vmatpush.msra.mxu0 0.0
        %1170 = vmatpush.msra.mxu0 0.0
        %1171 = vmatpush.msra.mxu0 0.0
        %1172 = vmatpush.msra.mxu0 0.0
        %1173 = vmatpush.msra.mxu0 0.0
        %1174 = vmatpush.msra.mxu0 0.0
        %1175 = vmatpush.msra.mxu0 0.0
        %1176 = vmatpush.msra.mxu0 0.0
        %1177 = vmatpush.msra.mxu0 %v1157
        %1178 = vmatmul.f32.gmra.mxu0 %v1160
        %v1179 = vpop.f32.mrf.mxu0
        %v1180 = vadd.f32 0.0, %v1179
        %1181 = vdwg.mxu0
        %v1182 = vrcp.pop %v1155
        %v1183 = vmul.f32 %v1155, %v1182
        %v1184 = vsub.f32 1.0, %v1183
        %v1185 = vmul.f32 %v1182, %v1184
        %v1186 = vadd.f32 %v1182, %v1185
        %vm1187 = vweird.f32 %v1155
        %vm1188 = vweird.f32 %v1182
        %vm1189 = vmor %vm1187, %vm1188
        %v1190 = vsel %vm1189, %v1182, %v1186
        %v1191 = vand.u32 2147483647, %v1155
        %vm1192 = vcmp.eq.f32.partialorder %v1191, 8.507059e+37
        %v1193 = vand.u32 %v1155, 2147483648
        %v1194 = vor.u32 1.1754944e-38, %v1193
        %v1195 = vsel %vm1192, %v1194, %v1190
        %v1196 = vmul.f32 %v1180, %v1195
        %1197 = vrot.lane.b32.xlu0 %v615, 48
        %v1198 = vpop.permute.xlu0 %1197
        %1199 = vrot.lane.b32.xlu0 %v615, 32
        %v1200 = vpop.permute.xlu0 %1199
        %v1201 = vsel %vm622, %v1198, 0
        %v1203 = vsel %vm622, %v1200, 0
        %1205 = vmatpush.xpose.msra.mxu0 0.0
        %1206 = vmatpush.xpose.msra.mxu0 0.0
        %1207 = vmatpush.xpose.msra.mxu0 0.0
        %1208 = vmatpush.xpose.msra.mxu0 0.0
        %1209 = vmatpush.xpose.msra.mxu0 0.0
        %1210 = vmatpush.xpose.msra.mxu0 0.0
        %1211 = vmatpush.xpose.msra.mxu0 0.0
        %1212 = vmatpush.xpose.msra.mxu0 0.0
        %1213 = vmatpush.xpose.msra.mxu0 0.0
        %1214 = vmatpush.xpose.msra.mxu0 0.0
        %1215 = vmatpush.xpose.msra.mxu0 0.0
        %1216 = vmatpush.xpose.msra.mxu0 0.0
        %1217 = vmatpush.xpose.msra.mxu0 0.0
        %1218 = vmatpush.xpose.msra.mxu0 0.0
        %1219 = vmatpush.xpose.msra.mxu0 0.0
        %1220 = vmatpush.xpose.msra.mxu0 %v1203
        %1221 = vmatmul.f32.gmra.mxu0 %v1201
        %v1222 = vpop.f32.mrf.mxu0
        %v1223 = vadd.f32 0.0, %v1222
        %1224 = vdwg.mxu0
        %v1225 = vmul.f32 %v1223, %v617
        %v1226 = vadd.f32 %v1225, %v618
        %s1227 = scalar_lea.vmem [#allocation12], 56
        %v1228 = vld [vmem:[%s1227] sm:$0xff]
        %v1229 = vadd.f32 %v1226, %v1228
        %v1230 = vsel %vm651, %v1229, -inf
        %1231 = vmax.xlane.f32.xlu0 %v1230
        %v1232 = vpop.xlane.xlu0 %1231
        %v1233 = vsub.f32 %v1229, %v1232
        %v1234 = vmul.f32 %v1233, 1.442695
        %v1235 = vpow.pop %v1234
        %v1236 = vsel %vm651, %v1235, 0.0
        %1237 = vadd.xlane.f32.xlu0 %v1236
        %v1238 = vpop.xlane.xlu0 %1237
        %1239 = vrot.lane.b32.xlu0 %v615, 16
        %v1240 = vpop.permute.xlu0 %1239
        %v1243 = vsel %vm651, %v1235, 0
        %1245 = vmatpush.msra.mxu0 0.0
        %1246 = vmatpush.msra.mxu0 0.0
        %1247 = vmatpush.msra.mxu0 0.0
        %1248 = vmatpush.msra.mxu0 0.0
        %1249 = vmatpush.msra.mxu0 0.0
        %1250 = vmatpush.msra.mxu0 0.0
        %1251 = vmatpush.msra.mxu0 0.0
        %1252 = vmatpush.msra.mxu0 0.0
        %1253 = vmatpush.msra.mxu0 0.0
        %1254 = vmatpush.msra.mxu0 0.0
        %1255 = vmatpush.msra.mxu0 0.0
        %1256 = vmatpush.msra.mxu0 0.0
        %1257 = vmatpush.msra.mxu0 0.0
        %1258 = vmatpush.msra.mxu0 0.0
        %1259 = vmatpush.msra.mxu0 0.0
        %1260 = vmatpush.msra.mxu0 %v1240
        %1261 = vmatmul.f32.gmra.mxu0 %v1243
        %v1262 = vpop.f32.mrf.mxu0
        %v1263 = vadd.f32 0.0, %v1262
        %1264 = vdwg.mxu0
        %v1265 = vrcp.pop %v1238
        %v1266 = vmul.f32 %v1238, %v1265
        %v1267 = vsub.f32 1.0, %v1266
        %v1268 = vmul.f32 %v1265, %v1267
        %v1269 = vadd.f32 %v1265, %v1268
        %vm1270 = vweird.f32 %v1238
        %vm1271 = vweird.f32 %v1265
        %vm1272 = vmor %vm1270, %vm1271
        %v1273 = vsel %vm1272, %v1265, %v1269
        %v1274 = vand.u32 2147483647, %v1238
        %vm1275 = vcmp.eq.f32.partialorder %v1274, 8.507059e+37
        %v1276 = vand.u32 %v1238, 2147483648
        %v1277 = vor.u32 1.1754944e-38, %v1276
        %v1278 = vsel %vm1275, %v1277, %v1273
        %v1279 = vmul.f32 %v1263, %v1278
        %1281 = vrot.lane.b32.xlu0 %v784, 16
        %v1282 = vpop.permute.xlu0 %1281
        %1285 = vrot.lane.b32.xlu0 %v864, 32
        %v1286 = vpop.permute.xlu0 %1285
        %1289 = vrot.lane.b32.xlu0 %v948, 48
        %v1290 = vpop.permute.xlu0 %1289
        %1293 = vrot.lane.b32.xlu0 %v1031, 64
        %v1294 = vpop.permute.xlu0 %1293
        %1297 = vrot.lane.b32.xlu0 %v1113, 80
        %v1298 = vpop.permute.xlu0 %1297
        %1301 = vrot.lane.b32.xlu0 %v1196, 96
        %v1302 = vpop.permute.xlu0 %1301
        %1305 = vrot.lane.b32.xlu0 %v1279, 112
        %v1306 = vpop.permute.xlu0 %1305
        %v1308 = vsel %vm622, %v701, %v1282
        %vm1309 = vcmask 261120
        %v1310 = vsel %vm1309, %v1308, %v1286
        %vm1311 = vcmask 392192
        %v1312 = vsel %vm1311, %v1310, %v1290
        %vm1313 = vcmask 523264
        %v1314 = vsel %vm1313, %v1312, %v1294
        %vm1315 = vcmask 654336
        %v1316 = vsel %vm1315, %v1314, %v1298
        %vm1317 = vcmask 785408
        %v1318 = vsel %vm1317, %v1316, %v1302
        %vm1319 = vcmask 916480
        %v1320 = vsel %vm1319, %v1318, %v1306
        %v1321 = vld [vmem:[#allocation3] sm:$0xff]
        %v1322 = vld [vmem:[#allocation10] sm:$0xff]
        %v1323 = vld [vmem:[#allocation10 + $0x8] sm:$0xff]
        %v1324 = vld [vmem:[#allocation10 + $0x10] sm:$0xff]
        %v1325 = vld [vmem:[#allocation10 + $0x18] sm:$0xff]
        %v1326 = vld [vmem:[#allocation10 + $0x20] sm:$0xff]
        %v1327 = vld [vmem:[#allocation10 + $0x28] sm:$0xff]
        %v1328 = vld [vmem:[#allocation10 + $0x30] sm:$0xff]
        %v1329 = vld [vmem:[#allocation10 + $0x38] sm:$0xff]
        %v1330 = vld [vmem:[#allocation10 + $0x40] sm:$0xff]
        %v1331 = vld [vmem:[#allocation10 + $0x48] sm:$0xff]
        %v1332 = vld [vmem:[#allocation10 + $0x50] sm:$0xff]
        %v1333 = vld [vmem:[#allocation10 + $0x58] sm:$0xff]
        %v1334 = vld [vmem:[#allocation10 + $0x60] sm:$0xff]
        %v1335 = vld [vmem:[#allocation10 + $0x68] sm:$0xff]
        %v1336 = vld [vmem:[#allocation10 + $0x70] sm:$0xff]
        %v1337 = vld [vmem:[#allocation10 + $0x78] sm:$0xff]
        %1338 = vmatpush.msra.mxu0 %v1337
        %1339 = vmatpush.msra.mxu0 %v1336
        %1340 = vmatpush.msra.mxu0 %v1335
        %1341 = vmatpush.msra.mxu0 %v1334
        %1342 = vmatpush.msra.mxu0 %v1333
        %1343 = vmatpush.msra.mxu0 %v1332
        %1344 = vmatpush.msra.mxu0 %v1331
        %1345 = vmatpush.msra.mxu0 %v1330
        %1346 = vmatpush.msra.mxu0 %v1329
        %1347 = vmatpush.msra.mxu0 %v1328
        %1348 = vmatpush.msra.mxu0 %v1327
        %1349 = vmatpush.msra.mxu0 %v1326
        %1350 = vmatpush.msra.mxu0 %v1325
        %1351 = vmatpush.msra.mxu0 %v1324
        %1352 = vmatpush.msra.mxu0 %v1323
        %1353 = vmatpush.msra.mxu0 %v1322
        %1354 = vmatmul.f32.gmra.mxu0 %v1320
        %v1355 = vpop.f32.mrf.mxu0
        %v1356 = vadd.f32 0.0, %v1355
        %1357 = vdwg.mxu0
        %v1358 = vadd.f32 %v1321, %v1356
        %1359 = vst [vmem:[#allocation3] sm:$0xff] %v1358
        // Predicated region
        $region81: #{tpu_custom_call.1} parent=47 // pred_check
          %p1360 = pneg %p473
        $region82: #{tpu_custom_call.1} parent=47 // pred_check_branch
          %1362 = sbr.rel (%p1360) target = $region84
        $region83: #{tpu_custom_call.1} parent=47 // pred_region
          %v1363 = vld [vmem:[#allocation3] sm:$0xff]
          %1364 = vst [vmem:[%s470] sm:$0xff] %v1363
        $region84: #{tpu_custom_call.1} parent=47 // pred_fallthru
          _
        %s1365 = sand.u32 %s226, 1
        %s1366 = scalar_lea.sflag [#allocation6], %s1365
        %s1367 = sand.u32 %s226, 1
        %s1368 = smul.addr %s1367, 8
        %s1369 = scalar_lea.vmem [#allocation16], %s1368
        // Predicated region
        $region85: #{tpu_custom_call.1} parent=47 // pred_check
          %p1370 = pneg %p236
        $region86: #{tpu_custom_call.1} parent=47 // pred_check_branch
          %1372 = sbr.rel (%p1370) target = $region88
        $region87: #{tpu_custom_call.1} parent=47 // pred_region
          %1374 = vsyncadd %s1366, 0
          %s1375 = smul.addr %s33, 8
          %s1376 = scalar_lea.hbm %s7, %s1375
          %s1378 = sshll.u32 %s1369, 4
          %s1379 = int_to_ptr.vmem [resolvable:$true] %s1378
          %s1380 = sshll.u32 %s1376, 4
          %s1381 = int_to_ptr.hbm [resolvable:$true] %s1380
          %1383 = dma.vmem_to_hbm [thread:$0]  %s1379, 128, %s1381, %s1366
        $region88: #{tpu_custom_call.1} parent=47 // pred_fallthru
          _
      $region48: #{tpu_custom_call.1} parent=5 // pred_fallthru
        _
      %p1384 = scmp.le.s32.totalorder 2, %s24
      // Predicated region
      $region89: #{tpu_custom_call.1} parent=5 // pred_check
        %p1385 = pneg %p1384
      $region90: #{tpu_custom_call.1} parent=5 // pred_check_branch
        %1387 = sbr.rel (%p1385) target = $region92
      $region91: #{tpu_custom_call.1} parent=5 // pred_region
        %s1388 = ssub.s32 %s24, 2
        // Predicated region
        $region93: #{tpu_custom_call.1} parent=91 // pred_check
          %p1389 = pneg %p242
        $region94: #{tpu_custom_call.1} parent=91 // pred_check_branch
          %1391 = sbr.rel (%p1389) target = $region96
        $region95: #{tpu_custom_call.1} parent=91 // pred_region
          %s1392 = sand.u32 %s227, 1
          %s1393 = scalar_lea.sflag [#allocation6], %s1392
          %s1394 = sand.u32 %s227, 1
          %s1395 = smul.addr %s1394, 8
          %s1396 = scalar_lea.vmem [#allocation16], %s1395
          %1398 = dma.done %s1393, 128
        $region96: #{tpu_custom_call.1} parent=91 // pred_fallthru
          _
      $region92: #{tpu_custom_call.1} parent=5 // pred_fallthru
        _
    $region6: #{tpu_custom_call.1} parent=1 // loop_footer
      %s28 = sadd.s32 1, %s24
    $region7: #{tpu_custom_call.1} parent=1 // loop_footer_branch
      %23 = sbr.rel target = $region3
    $region8: #{tpu_custom_call.1} parent=1 // loop_exit
      _
    %1399 = vsyncpa [#allocation5], 1
    %s1400 = scalar_lea.sflag [#allocation5], 1
    %1401 = vsyncpa %s1400, 1
    %1402 = vsyncpa [#allocation8], 1
    %1403 = vsyncpa [#allocation11], 1
    %1404 = vsyncpa [#allocation14], 1
    %s1405 = scalar_lea.sflag [#allocation14], 1
    %1406 = vsyncpa %s1405, 1
    %1407 = vsyncpa [#allocation6], 1
    %s1408 = scalar_lea.sflag [#allocation6], 1
    %1409 = vsyncpa %s1408, 1

</llo_original>
